<compile_context>
chip_gen: v7x
topology: tpu7x:2x2x1
jax: 0.10.0
libtpu: 0.0.40
codegen_flags: <defaults>
</compile_context>

<pallas_src>
import functools

import jax
import jax.numpy as jnp
from jax import lax
from jax.experimental import pallas as pl
from jax.experimental.pallas import tpu as pltpu

EPS = 1e-5  # PyTorch nn.LayerNorm default eps


def _layernorm(v, g, b):
    mu = jnp.mean(v, axis=-1, keepdims=True)
    var = jnp.mean((v - mu) ** 2, axis=-1, keepdims=True)
    return (v - mu) * lax.rsqrt(var + EPS) * g + b


def _attn_kernel(num_heads, head_dim, scale, compute_dtype,
                 x_ref, y_ref,
                 gr_ref, br_ref, gd_ref, bd_ref,
                 wq_ref, bq_ref, wkv_ref, bkv_ref,
                 wpr_ref, bpr_ref,
                 out_r_ref, out_dT_ref,
                 or_acc_ref):
    cd = compute_dtype

    # LayerNorms in f32.
    xn = _layernorm(x_ref[0], gr_ref[...], br_ref[...])
    yn = _layernorm(y_ref[0], gd_ref[...], bd_ref[...])

    # q from the y stream.  The softmax scale is folded into q ONCE here
    # ((N,C) VPU mul) instead of scaling every per-head (N,N) score matrix.
    q = (jnp.dot(yn.astype(cd), wq_ref[...],
                 preferred_element_type=jnp.float32) + bq_ref[...]) * scale
    # v_r | k_d | v_d fused into ONE wide matmul on the x stream
    # (one bias broadcast instead of three).  bf16 operands, f32 accumulation.
    kvx = jnp.dot(xn.astype(cd), wkv_ref[...],
                  preferred_element_type=jnp.float32) + bkv_ref[...]

    N, C = q.shape
    vr = kvx[:, 0:C]
    k = kvx[:, C:2 * C]
    vd = kvx[:, 2 * C:3 * C]

    # Static per-head loop (num_heads is a small compile-time constant).
    # TODO(synk): for production sizes with head_dim < 128, a head-major
    # (H, N, hd) batched-dot layout would also remove the per-head lane slices.
    for h in range(num_heads):
        sl = slice(h * head_dim, (h + 1) * head_dim)
        qh = q[:, sl].astype(cd)
        kh = k[:, sl].astype(cd)

        # Shared (already scaled) score matrix, computed ONCE per head:
        # s[i, j] = scale * q_i . k_j.
        s = lax.dot_general(qh, kh, (((1,), (1,)), ((), ())),
                            preferred_element_type=jnp.float32)

        # attn_r = row softmax of s; attn_d = softmax over rows of s.T, i.e.
        # the COLUMN softmax of s.  Softmax is shift-invariant, so ONE
        # global-max shift is exact and both softmaxes share a single exp()
        # (halves EUP work).  The 1/denominator scaling is deferred to AFTER
        # the value matmuls, turning two (N,N) muls into an (N,hd) and an
        # (hd,N) mul; denominators use the EUP approximate reciprocal.
        e = jnp.exp(s - jnp.max(s, keepdims=True))
        inv_row = pl.reciprocal(jnp.sum(e, axis=-1, keepdims=True), approx=True)
        inv_col = pl.reciprocal(jnp.sum(e, axis=0, keepdims=True), approx=True)
        e_cd = e.astype(cd)

        # out_r head: softmax_row(s) @ v_r == inv_row * (e @ v_r) -> (N, hd).
        # Collected in VMEM scratch so proj_r runs as ONE (N,C)x(C,C) matmul
        # after the loop (K = C, not K = head_dim).
        or_acc_ref[:, sl] = inv_row * jnp.dot(
            e_cd, vr[:, sl].astype(cd), preferred_element_type=jnp.float32)

        # out_d head, produced directly TRANSPOSED:
        # (softmax_col(s).T @ v_d).T == (v_d.T @ e) * inv_col -> (hd, N),
        # written as full lane-dense rows of the (C, N) output block.
        out_dT_ref[0, sl, :] = lax.dot_general(
            vd[:, sl].astype(cd), e_cd, (((0,), (0,)), ((), ())),
            preferred_element_type=jnp.float32) * inv_col

    # proj_r fused: single wide matmul + one bias broadcast.
    out_r_ref[0] = (jnp.dot(or_acc_ref[...].astype(cd), wpr_ref[...],
                            preferred_element_type=jnp.float32)
                    + bpr_ref[...]).astype(out_r_ref.dtype)


def _linear_kernel(compute_dtype, x_ref, w_ref, b_ref, o_ref):
    o_ref[0] = (jnp.dot(x_ref[0].astype(compute_dtype), w_ref[...],
                        preferred_element_type=jnp.float32)
                + b_ref[...]).astype(o_ref.dtype)


def attn_pallas(x, y, pp, num_heads, compute_dtype):
    B, N, C = x.shape
    hd = C // num_heads
    scale = hd ** (-0.5)
    kernel = functools.partial(_attn_kernel, num_heads, hd, scale, compute_dtype)

    tok_spec = pl.BlockSpec((1, N, C), lambda b: (b, 0, 0))
    outdT_spec = pl.BlockSpec((1, C, N), lambda b: (b, 0, 0))
    vecC = pl.BlockSpec((1, C), lambda b: (0, 0))
    vec3C = pl.BlockSpec((1, 3 * C), lambda b: (0, 0))
    matQ = pl.BlockSpec((C, C), lambda b: (0, 0))
    matKV = pl.BlockSpec((C, 3 * C), lambda b: (0, 0))

    return pl.pallas_call(
        kernel,
        grid=(B,),
        in_specs=[tok_spec, tok_spec,
                  vecC, vecC, vecC, vecC,
                  matQ, vecC,
                  matKV, vec3C,
                  matQ, vecC],
        out_specs=(tok_spec, outdT_spec),
        out_shape=(jax.ShapeDtypeStruct((B, N, C), jnp.float32),
                   jax.ShapeDtypeStruct((B, C, N), jnp.float32)),
        scratch_shapes=[pltpu.VMEM((N, C), jnp.float32)],
        compiler_params=pltpu.CompilerParams(
            dimension_semantics=("parallel",),
            vmem_limit_bytes=32 * 1024 * 1024),
    )(x, y, pp['gr'], pp['br'], pp['gd'], pp['bd'],
      pp['wq'], pp['bq'], pp['wkv'], pp['bkv'],
      pp['wpr'], pp['bpr'])


def linear_pallas(v, w, b, compute_dtype):
    B, N, C = v.shape
    kernel = functools.partial(_linear_kernel, compute_dtype)
    return pl.pallas_call(
        kernel,
        grid=(B,),
        in_specs=[pl.BlockSpec((1, N, C), lambda i: (i, 0, 0)),
                  pl.BlockSpec((C, C), lambda i: (0, 0)),
                  pl.BlockSpec((1, C), lambda i: (0, 0))],
        out_specs=pl.BlockSpec((1, N, C), lambda i: (i, 0, 0)),
        out_shape=jax.ShapeDtypeStruct((B, N, C), jnp.float32),
        compiler_params=pltpu.CompilerParams(
            dimension_semantics=("parallel",),
            vmem_limit_bytes=32 * 1024 * 1024),
    )(v, w, b)


def prepare_params(p, compute_dtype):
    """Fuse the x-stream QKV weights and cast matmul weights to compute_dtype.

    One-time parameter prep — cache the result in real use.
    """
    cd = compute_dtype
    return {
        'gr': p['gr'], 'br': p['br'], 'gd': p['gd'], 'bd': p['bd'],
        'wq': p['wq'].astype(cd), 'bq': p['bq'],
        'wkv': jnp.concatenate([p['wvr'], p['wk'], p['wvd']], axis=1).astype(cd),
        'bkv': jnp.concatenate([p['bvr'], p['bk'], p['bvd']], axis=1),
        'wpr': p['wpr'].astype(cd), 'bpr': p['bpr'],
        'wpd': p['wpd'].astype(cd), 'bpd': p['bpd'],
    }


def share_att_cross_attention(x, y, params, num_heads,
                              compute_dtype=jnp.bfloat16):
    B, N, C = x.shape
    pp = prepare_params(params, compute_dtype)
    out_r, out_dT = attn_pallas(x, y, pp, num_heads, compute_dtype)
    # out_dT is (B, C, N) — exactly the module's `.transpose(1,2)` of the
    # head-concat out_d — so the extra transpose+reshape glue is a FREE
    # contiguous reshape (no data movement, no extra HBM pass).
    out_d_perm = out_dT.reshape(B, N, C)
    # TODO(synk): fold proj_d into the attention kernel (needs an in-kernel
    # (C,N)->(N,C) relayout) and tile N on a second grid axis for long
    # sequences on v7x (64 MiB VMEM, 2 TensorCores).
    out_d = linear_pallas(out_d_perm, pp['wpd'], pp['bpd'], compute_dtype)
    return out_r, out_d


# ---------------- pure-JAX reference (mirrors the PyTorch forward) ----------
def reference_forward(x, y, p, num_heads):
    B, N, C = x.shape
    hd = C // num_heads
    scale = hd ** (-0.5)

    def ln(v, g, b):
        mu = v.mean(-1, keepdims=True)
        var = ((v - mu) ** 2).mean(-1, keepdims=True)
        return (v - mu) / jnp.sqrt(var + EPS) * g + b

    def lin(v, w, b):
        return v @ w + b

    def heads(v):
        return v.reshape(B, N, num_heads, hd).transpose(0, 2, 1, 3)

    xn = ln(x, p['gr'], p['br'])
    yn = ln(y, p['gd'], p['bd'])
    q = heads(lin(yn, p['wq'], p['bq']))
    vr = heads(lin(xn, p['wvr'], p['bvr']))
    k = heads(lin(xn, p['wk'], p['bk']))
    vd = heads(lin(xn, p['wvd'], p['bvd']))

    attn_r = jnp.einsum('bhnd,bhmd->bhnm', q, k) * scale
    attn_d = attn_r.transpose(0, 1, 3, 2)
    attn_r = jax.nn.softmax(attn_r, axis=-1)
    attn_d = jax.nn.softmax(attn_d, axis=-1)

    out_r = jnp.einsum('bhnm,bhmd->bhnd', attn_r, vr)
    out_r = out_r.transpose(0, 2, 1, 3).reshape(B, N, C)
    out_r = lin(out_r, p['wpr'], p['bpr'])

    out_d = jnp.einsum('bhnm,bhmd->bhnd', attn_d, vd)
    out_d = out_d.transpose(0, 2, 1, 3).reshape(B, N, C)
    out_d = out_d.transpose(0, 2, 1).reshape(B, N, C)
    out_d = lin(out_d, p['wpd'], p['bpd'])
    return out_r, out_d


if __name__ == "__main__":
    B, N, C, num_heads = 2, 16, 32, 4

    key = jax.random.PRNGKey(0)
    ks = jax.random.split(key, 20)

    def wmat(k_):
        return jax.random.normal(k_, (C, C), jnp.float32) * 0.05

    def bvec(k_):
        return jax.random.normal(k_, (1, C), jnp.float32) * 0.02

    params = {
        'gr': jnp.ones((1, C), jnp.float32), 'br': jnp.zeros((1, C), jnp.float32),
        'gd': jnp.ones((1, C), jnp.float32), 'bd': jnp.zeros((1, C), jnp.float32),
        'wq': wmat(ks[0]), 'bq': bvec(ks[1]),
        'wvr': wmat(ks[2]), 'bvr': bvec(ks[3]),
        'wk': wmat(ks[4]), 'bk': bvec(ks[5]),
        'wvd': wmat(ks[6]), 'bvd': bvec(ks[7]),
        'wpr': wmat(ks[8]), 'bpr': bvec(ks[9]),
        'wpd': wmat(ks[10]), 'bpd': bvec(ks[11]),
    }

    x = jax.random.normal(ks[12], (B, N, C), jnp.float32)
    y = jax.random.normal(ks[13], (B, N, C), jnp.float32)

    ref_r, ref_d = reference_forward(x, y, params, num_heads)

    # f32-operand path: tight check of the fused structure / permutations
    # (tolerance only absorbs the approximate-reciprocal softmax denominator).
    out_r32, out_d32 = share_att_cross_attention(
        x, y, params, num_heads, compute_dtype=jnp.float32)
    jax.block_until_ready((out_r32, out_d32))
    assert jnp.allclose(out_r32, ref_r, atol=5e-3, rtol=5e-3), "out_r mismatch (f32)"
    assert jnp.allclose(out_d32, ref_d, atol=5e-3, rtol=5e-3), "out_d mismatch (f32)"

    # bf16-operand path (MXU-friendly config for v6e/v7x): looser tolerance.
    out_r16, out_d16 = share_att_cross_attention(
        x, y, params, num_heads, compute_dtype=jnp.bfloat16)
    jax.block_until_ready((out_r16, out_d16))
    assert jnp.allclose(out_r16, ref_r, atol=5e-2, rtol=5e-2), "out_r mismatch (bf16)"
    assert jnp.allclose(out_d16, ref_d, atol=5e-2, rtol=5e-2), "out_d mismatch (bf16)"

    print("KERNEL_OK")
</pallas_src>

<mosaic_0001>
module attributes {stable_mosaic.version = 11 : i64} {
  func.func @_attn_kernel(%arg0: i32, %arg1: memref<1x16x32xf32, #tpu.memory_space<vmem>>, %arg2: memref<1x16x32xf32, #tpu.memory_space<vmem>>, %arg3: memref<1x32xf32, #tpu.memory_space<vmem>>, %arg4: memref<1x32xf32, #tpu.memory_space<vmem>>, %arg5: memref<1x32xf32, #tpu.memory_space<vmem>>, %arg6: memref<1x32xf32, #tpu.memory_space<vmem>>, %arg7: memref<32x32xf32, #tpu.memory_space<vmem>>, %arg8: memref<1x32xf32, #tpu.memory_space<vmem>>, %arg9: memref<32x96xf32, #tpu.memory_space<vmem>>, %arg10: memref<1x96xf32, #tpu.memory_space<vmem>>, %arg11: memref<32x32xf32, #tpu.memory_space<vmem>>, %arg12: memref<1x32xf32, #tpu.memory_space<vmem>>, %arg13: memref<1x16x32xf32, #tpu.memory_space<vmem>>, %arg14: memref<1x32x16xf32, #tpu.memory_space<vmem>>, %arg15: memref<16x32xf32, #tpu.memory_space<vmem>>) attributes {dimension_semantics = [#tpu.dimension_semantics<parallel>], iteration_bounds = array<i64: 2>, scalar_prefetch = 0 : i64, scratch_operands = 1 : i64, tpu.core_type = #tpu.core_type<tc>, window_params = [{transform_indices = @transform_0, window_bounds = array<i64: 1, 16, 32>}, {transform_indices = @transform_1, window_bounds = array<i64: 1, 16, 32>}, {pipeline_mode = #tpu.pipeline_mode<synchronous>, transform_indices = @transform_2, window_bounds = array<i64: 1, 32>}, {pipeline_mode = #tpu.pipeline_mode<synchronous>, transform_indices = @transform_3, window_bounds = array<i64: 1, 32>}, {pipeline_mode = #tpu.pipeline_mode<synchronous>, transform_indices = @transform_4, window_bounds = array<i64: 1, 32>}, {pipeline_mode = #tpu.pipeline_mode<synchronous>, transform_indices = @transform_5, window_bounds = array<i64: 1, 32>}, {pipeline_mode = #tpu.pipeline_mode<synchronous>, transform_indices = @transform_6, window_bounds = array<i64: 32, 32>}, {pipeline_mode = #tpu.pipeline_mode<synchronous>, transform_indices = @transform_7, window_bounds = array<i64: 1, 32>}, {pipeline_mode = #tpu.pipeline_mode<synchronous>, transform_indices = @transform_8, window_bounds = array<i64: 32, 96>}, {pipeline_mode = #tpu.pipeline_mode<synchronous>, transform_indices = @transform_9, window_bounds = array<i64: 1, 96>}, {pipeline_mode = #tpu.pipeline_mode<synchronous>, transform_indices = @transform_10, window_bounds = array<i64: 32, 32>}, {pipeline_mode = #tpu.pipeline_mode<synchronous>, transform_indices = @transform_11, window_bounds = array<i64: 1, 32>}, {transform_indices = @transform_12, window_bounds = array<i64: 1, 16, 32>}, {transform_indices = @transform_13, window_bounds = array<i64: 1, 32, 16>}]} {
    %c0 = arith.constant 0 : index
    %c0_0 = arith.constant 0 : index
    %c0_1 = arith.constant 0 : index
    %0 = vector.load %arg1[%c0, %c0_0, %c0_1] : memref<1x16x32xf32, #tpu.memory_space<vmem>>, vector<1x16x32xf32>
    %1 = vector.shape_cast %0 : vector<1x16x32xf32> to vector<16x32xf32>
    %c0_2 = arith.constant 0 : index
    %c0_3 = arith.constant 0 : index
    %2 = vector.load %arg3[%c0_2, %c0_3] : memref<1x32xf32, #tpu.memory_space<vmem>>, vector<1x32xf32>
    %c0_4 = arith.constant 0 : index
    %c0_5 = arith.constant 0 : index
    %3 = vector.load %arg4[%c0_4, %c0_5] : memref<1x32xf32, #tpu.memory_space<vmem>>, vector<1x32xf32>
    %cst = arith.constant dense<0.000000e+00> : vector<16xf32>
    %4 = vector.multi_reduction <add>, %1, %cst [1] : vector<16x32xf32> to vector<16xf32>
    %5 = vector.shape_cast %4 : vector<16xf32> to vector<16x1xf32>
    %cst_6 = arith.constant 3.200000e+01 : f32
    %6 = vector.broadcast %cst_6 : f32 to vector<16x1xf32>
    %7 = arith.divf %5, %6 : vector<16x1xf32>
    %8 = vector.broadcast %7 : vector<16x1xf32> to vector<16x32xf32>
    %9 = arith.subf %1, %8 : vector<16x32xf32>
    %10 = arith.mulf %9, %9 : vector<16x32xf32>
    %cst_7 = arith.constant dense<0.000000e+00> : vector<16xf32>
    %11 = vector.multi_reduction <add>, %10, %cst_7 [1] : vector<16x32xf32> to vector<16xf32>
    %12 = vector.shape_cast %11 : vector<16xf32> to vector<16x1xf32>
    %cst_8 = arith.constant 3.200000e+01 : f32
    %13 = vector.broadcast %cst_8 : f32 to vector<16x1xf32>
    %14 = arith.divf %12, %13 : vector<16x1xf32>
    %15 = vector.broadcast %7 : vector<16x1xf32> to vector<16x32xf32>
    %16 = arith.subf %1, %15 : vector<16x32xf32>
    %cst_9 = arith.constant 9.99999974E-6 : f32
    %17 = vector.broadcast %cst_9 : f32 to vector<16x1xf32>
    %18 = arith.addf %14, %17 : vector<16x1xf32>
    %19 = math.rsqrt %18 : vector<16x1xf32>
    %20 = vector.broadcast %19 : vector<16x1xf32> to vector<16x32xf32>
    %21 = arith.mulf %16, %20 : vector<16x32xf32>
    %22 = vector.broadcast %2 : vector<1x32xf32> to vector<16x32xf32>
    %23 = arith.mulf %21, %22 : vector<16x32xf32>
    %24 = vector.broadcast %3 : vector<1x32xf32> to vector<16x32xf32>
    %25 = arith.addf %23, %24 : vector<16x32xf32>
    %c0_10 = arith.constant 0 : index
    %c0_11 = arith.constant 0 : index
    %c0_12 = arith.constant 0 : index
    %26 = vector.load %arg2[%c0_10, %c0_11, %c0_12] : memref<1x16x32xf32, #tpu.memory_space<vmem>>, vector<1x16x32xf32>
    %27 = vector.shape_cast %26 : vector<1x16x32xf32> to vector<16x32xf32>
    %c0_13 = arith.constant 0 : index
    %c0_14 = arith.constant 0 : index
    %28 = vector.load %arg5[%c0_13, %c0_14] : memref<1x32xf32, #tpu.memory_space<vmem>>, vector<1x32xf32>
    %c0_15 = arith.constant 0 : index
    %c0_16 = arith.constant 0 : index
    %29 = vector.load %arg6[%c0_15, %c0_16] : memref<1x32xf32, #tpu.memory_space<vmem>>, vector<1x32xf32>
    %cst_17 = arith.constant dense<0.000000e+00> : vector<16xf32>
    %30 = vector.multi_reduction <add>, %27, %cst_17 [1] : vector<16x32xf32> to vector<16xf32>
    %31 = vector.shape_cast %30 : vector<16xf32> to vector<16x1xf32>
    %cst_18 = arith.constant 3.200000e+01 : f32
    %32 = vector.broadcast %cst_18 : f32 to vector<16x1xf32>
    %33 = arith.divf %31, %32 : vector<16x1xf32>
    %34 = vector.broadcast %33 : vector<16x1xf32> to vector<16x32xf32>
    %35 = arith.subf %27, %34 : vector<16x32xf32>
    %36 = arith.mulf %35, %35 : vector<16x32xf32>
    %cst_19 = arith.constant dense<0.000000e+00> : vector<16xf32>
    %37 = vector.multi_reduction <add>, %36, %cst_19 [1] : vector<16x32xf32> to vector<16xf32>
    %38 = vector.shape_cast %37 : vector<16xf32> to vector<16x1xf32>
    %cst_20 = arith.constant 3.200000e+01 : f32
    %39 = vector.broadcast %cst_20 : f32 to vector<16x1xf32>
    %40 = arith.divf %38, %39 : vector<16x1xf32>
    %41 = vector.broadcast %33 : vector<16x1xf32> to vector<16x32xf32>
    %42 = arith.subf %27, %41 : vector<16x32xf32>
    %cst_21 = arith.constant 9.99999974E-6 : f32
    %43 = vector.broadcast %cst_21 : f32 to vector<16x1xf32>
    %44 = arith.addf %40, %43 : vector<16x1xf32>
    %45 = math.rsqrt %44 : vector<16x1xf32>
    %46 = vector.broadcast %45 : vector<16x1xf32> to vector<16x32xf32>
    %47 = arith.mulf %42, %46 : vector<16x32xf32>
    %48 = vector.broadcast %28 : vector<1x32xf32> to vector<16x32xf32>
    %49 = arith.mulf %47, %48 : vector<16x32xf32>
    %50 = vector.broadcast %29 : vector<1x32xf32> to vector<16x32xf32>
    %51 = arith.addf %49, %50 : vector<16x32xf32>
    %c0_22 = arith.constant 0 : index
    %c0_23 = arith.constant 0 : index
    %52 = vector.load %arg7[%c0_22, %c0_23] : memref<32x32xf32, #tpu.memory_space<vmem>>, vector<32x32xf32>
    %cst_24 = arith.constant dense<0.000000e+00> : vector<16x32xf32>
    %53 = tpu.matmul %51, %52, %cst_24 {dimension_numbers = #tpu.dot_dimension_numbers<[1], [0], [0], [1], [0, 0, 1, 1], [], []>} : vector<16x32xf32>, vector<32x32xf32>, vector<16x32xf32> -> vector<16x32xf32>
    %c0_25 = arith.constant 0 : index
    %c0_26 = arith.constant 0 : index
    %54 = vector.load %arg8[%c0_25, %c0_26] : memref<1x32xf32, #tpu.memory_space<vmem>>, vector<1x32xf32>
    %55 = vector.broadcast %54 : vector<1x32xf32> to vector<16x32xf32>
    %56 = arith.addf %53, %55 : vector<16x32xf32>
    %cst_27 = arith.constant 0.353553385 : f32
    %57 = vector.broadcast %cst_27 : f32 to vector<16x32xf32>
    %58 = arith.mulf %56, %57 : vector<16x32xf32>
    %c0_28 = arith.constant 0 : index
    %c0_29 = arith.constant 0 : index
    %59 = vector.load %arg9[%c0_28, %c0_29] : memref<32x96xf32, #tpu.memory_space<vmem>>, vector<32x96xf32>
    %cst_30 = arith.constant dense<0.000000e+00> : vector<16x96xf32>
    %60 = tpu.matmul %25, %59, %cst_30 {dimension_numbers = #tpu.dot_dimension_numbers<[1], [0], [0], [1], [0, 0, 1, 1], [], []>} : vector<16x32xf32>, vector<32x96xf32>, vector<16x96xf32> -> vector<16x96xf32>
    %c0_31 = arith.constant 0 : index
    %c0_32 = arith.constant 0 : index
    %61 = vector.load %arg10[%c0_31, %c0_32] : memref<1x96xf32, #tpu.memory_space<vmem>>, vector<1x96xf32>
    %62 = vector.broadcast %61 : vector<1x96xf32> to vector<16x96xf32>
    %63 = arith.addf %60, %62 : vector<16x96xf32>
    %64 = vector.extract_strided_slice %63 {offsets = [0, 0], sizes = [16, 32], strides = [1, 1]} : vector<16x96xf32> to vector<16x32xf32>
    %65 = vector.extract_strided_slice %63 {offsets = [0, 32], sizes = [16, 32], strides = [1, 1]} : vector<16x96xf32> to vector<16x32xf32>
    %66 = vector.extract_strided_slice %63 {offsets = [0, 64], sizes = [16, 32], strides = [1, 1]} : vector<16x96xf32> to vector<16x32xf32>
    %67 = vector.extract_strided_slice %58 {offsets = [0, 0], sizes = [16, 8], strides = [1, 1]} : vector<16x32xf32> to vector<16x8xf32>
    %68 = vector.extract_strided_slice %65 {offsets = [0, 0], sizes = [16, 8], strides = [1, 1]} : vector<16x32xf32> to vector<16x8xf32>
    %cst_33 = arith.constant dense<0.000000e+00> : vector<16x16xf32>
    %69 = tpu.matmul %67, %68, %cst_33 {dimension_numbers = #tpu.dot_dimension_numbers<[1], [1], [0], [0], [0, 0, 1, 0], [], []>} : vector<16x8xf32>, vector<16x8xf32>, vector<16x16xf32> -> vector<16x16xf32>
    %70 = vector.shape_cast %69 : vector<16x16xf32> to vector<1x16x16xf32>
    %cst_34 = arith.constant dense<0xFF800000> : vector<1xf32>
    %71 = vector.multi_reduction <maximumf>, %70, %cst_34 [1, 2] : vector<1x16x16xf32> to vector<1xf32>
    %72 = vector.shape_cast %71 : vector<1xf32> to vector<1x1x1xf32>
    %73 = vector.extract %72[0, 0, 0] : f32 from vector<1x1x1xf32>
    %74 = vector.broadcast %73 : f32 to vector<1x1xf32>
    %75 = vector.broadcast %74 : vector<1x1xf32> to vector<16x16xf32>
    %76 = arith.subf %69, %75 : vector<16x16xf32>
    %77 = math.exp %76 : vector<16x16xf32>
    %cst_35 = arith.constant dense<0.000000e+00> : vector<16xf32>
    %78 = vector.multi_reduction <add>, %77, %cst_35 [1] : vector<16x16xf32> to vector<16xf32>
    %79 = vector.shape_cast %78 : vector<16xf32> to vector<16x1xf32>
    %80 = tpu.reciprocal %79 {approx = true} : vector<16x1xf32> -> vector<16x1xf32>
    %cst_36 = arith.constant dense<0.000000e+00> : vector<16xf32>
    %81 = vector.multi_reduction <add>, %77, %cst_36 [0] : vector<16x16xf32> to vector<16xf32>
    %82 = vector.shape_cast %81 : vector<16xf32> to vector<1x16xf32>
    %83 = tpu.reciprocal %82 {approx = true} : vector<1x16xf32> -> vector<1x16xf32>
    %84 = vector.extract_strided_slice %64 {offsets = [0, 0], sizes = [16, 8], strides = [1, 1]} : vector<16x32xf32> to vector<16x8xf32>
    %cst_37 = arith.constant dense<0.000000e+00> : vector<16x8xf32>
    %85 = tpu.matmul %77, %84, %cst_37 {dimension_numbers = #tpu.dot_dimension_numbers<[1], [0], [0], [1], [0, 0, 1, 1], [], []>} : vector<16x16xf32>, vector<16x8xf32>, vector<16x8xf32> -> vector<16x8xf32>
    %86 = vector.broadcast %80 : vector<16x1xf32> to vector<16x8xf32>
    %87 = arith.mulf %86, %85 : vector<16x8xf32>
    %c0_38 = arith.constant 0 : index
    %c0_39 = arith.constant 0 : index
    %88 = vector.load %arg15[%c0_38, %c0_39] : memref<16x32xf32, #tpu.memory_space<vmem>>, vector<16x8xf32>
    tpu.vector_store %arg15[%c0_38, %c0_39], %87 {strides = array<i32>} : memref<16x32xf32, #tpu.memory_space<vmem>>, vector<16x8xf32>,
    %89 = vector.extract_strided_slice %66 {offsets = [0, 0], sizes = [16, 8], strides = [1, 1]} : vector<16x32xf32> to vector<16x8xf32>
    %cst_40 = arith.constant dense<0.000000e+00> : vector<8x16xf32>
    %90 = tpu.matmul %89, %77, %cst_40 {dimension_numbers = #tpu.dot_dimension_numbers<[0], [0], [1], [1], [0, 1, 1, 1], [], []>} : vector<16x8xf32>, vector<16x16xf32>, vector<8x16xf32> -> vector<8x16xf32>
    %91 = vector.broadcast %83 : vector<1x16xf32> to vector<8x16xf32>
    %92 = arith.mulf %90, %91 : vector<8x16xf32>
    %c0_41 = arith.constant 0 : index
    %c0_42 = arith.constant 0 : index
    %c0_43 = arith.constant 0 : index
    %93 = vector.load %arg14[%c0_41, %c0_42, %c0_43] : memref<1x32x16xf32, #tpu.memory_space<vmem>>, vector<1x8x16xf32>
    %94 = vector.shape_cast %93 : vector<1x8x16xf32> to vector<8x16xf32>
    %95 = vector.shape_cast %92 : vector<8x16xf32> to vector<1x8x16xf32>
    tpu.vector_store %arg14[%c0_41, %c0_42, %c0_43], %95 {strides = array<i32>} : memref<1x32x16xf32, #tpu.memory_space<vmem>>, vector<1x8x16xf32>,
    %96 = vector.extract_strided_slice %58 {offsets = [0, 8], sizes = [16, 8], strides = [1, 1]} : vector<16x32xf32> to vector<16x8xf32>
    %97 = vector.extract_strided_slice %65 {offsets = [0, 8], sizes = [16, 8], strides = [1, 1]} : vector<16x32xf32> to vector<16x8xf32>
    %cst_44 = arith.constant dense<0.000000e+00> : vector<16x16xf32>
    %98 = tpu.matmul %96, %97, %cst_44 {dimension_numbers = #tpu.dot_dimension_numbers<[1], [1], [0], [0], [0, 0, 1, 0], [], []>} : vector<16x8xf32>, vector<16x8xf32>, vector<16x16xf32> -> vector<16x16xf32>
    %99 = vector.shape_cast %98 : vector<16x16xf32> to vector<1x16x16xf32>
    %cst_45 = arith.constant dense<0xFF800000> : vector<1xf32>
    %100 = vector.multi_reduction <maximumf>, %99, %cst_45 [1, 2] : vector<1x16x16xf32> to vector<1xf32>
    %101 = vector.shape_cast %100 : vector<1xf32> to vector<1x1x1xf32>
    %102 = vector.extract %101[0, 0, 0] : f32 from vector<1x1x1xf32>
    %103 = vector.broadcast %102 : f32 to vector<1x1xf32>
    %104 = vector.broadcast %103 : vector<1x1xf32> to vector<16x16xf32>
    %105 = arith.subf %98, %104 : vector<16x16xf32>
    %106 = math.exp %105 : vector<16x16xf32>
    %cst_46 = arith.constant dense<0.000000e+00> : vector<16xf32>
    %107 = vector.multi_reduction <add>, %106, %cst_46 [1] : vector<16x16xf32> to vector<16xf32>
    %108 = vector.shape_cast %107 : vector<16xf32> to vector<16x1xf32>
    %109 = tpu.reciprocal %108 {approx = true} : vector<16x1xf32> -> vector<16x1xf32>
    %cst_47 = arith.constant dense<0.000000e+00> : vector<16xf32>
    %110 = vector.multi_reduction <add>, %106, %cst_47 [0] : vector<16x16xf32> to vector<16xf32>
    %111 = vector.shape_cast %110 : vector<16xf32> to vector<1x16xf32>
    %112 = tpu.reciprocal %111 {approx = true} : vector<1x16xf32> -> vector<1x16xf32>
    %113 = vector.extract_strided_slice %64 {offsets = [0, 8], sizes = [16, 8], strides = [1, 1]} : vector<16x32xf32> to vector<16x8xf32>
    %cst_48 = arith.constant dense<0.000000e+00> : vector<16x8xf32>
    %114 = tpu.matmul %106, %113, %cst_48 {dimension_numbers = #tpu.dot_dimension_numbers<[1], [0], [0], [1], [0, 0, 1, 1], [], []>} : vector<16x16xf32>, vector<16x8xf32>, vector<16x8xf32> -> vector<16x8xf32>
    %115 = vector.broadcast %109 : vector<16x1xf32> to vector<16x8xf32>
    %116 = arith.mulf %115, %114 : vector<16x8xf32>
    %c0_49 = arith.constant 0 : index
    %c8 = arith.constant 8 : index
    %117 = vector.load %arg15[%c0_49, %c8] : memref<16x32xf32, #tpu.memory_space<vmem>>, vector<16x8xf32>
    tpu.vector_store %arg15[%c0_49, %c8], %116 {strides = array<i32>} : memref<16x32xf32, #tpu.memory_space<vmem>>, vector<16x8xf32>,
    %118 = vector.extract_strided_slice %66 {offsets = [0, 8], sizes = [16, 8], strides = [1, 1]} : vector<16x32xf32> to vector<16x8xf32>
    %cst_50 = arith.constant dense<0.000000e+00> : vector<8x16xf32>
    %119 = tpu.matmul %118, %106, %cst_50 {dimension_numbers = #tpu.dot_dimension_numbers<[0], [0], [1], [1], [0, 1, 1, 1], [], []>} : vector<16x8xf32>, vector<16x16xf32>, vector<8x16xf32> -> vector<8x16xf32>
    %120 = vector.broadcast %112 : vector<1x16xf32> to vector<8x16xf32>
    %121 = arith.mulf %119, %120 : vector<8x16xf32>
    %c0_51 = arith.constant 0 : index
    %c8_52 = arith.constant 8 : index
    %c0_53 = arith.constant 0 : index
    %122 = vector.load %arg14[%c0_51, %c8_52, %c0_53] : memref<1x32x16xf32, #tpu.memory_space<vmem>>, vector<1x8x16xf32>
    %123 = vector.shape_cast %122 : vector<1x8x16xf32> to vector<8x16xf32>
    %124 = vector.shape_cast %121 : vector<8x16xf32> to vector<1x8x16xf32>
    tpu.vector_store %arg14[%c0_51, %c8_52, %c0_53], %124 {strides = array<i32>} : memref<1x32x16xf32, #tpu.memory_space<vmem>>, vector<1x8x16xf32>,
    %125 = vector.extract_strided_slice %58 {offsets = [0, 16], sizes = [16, 8], strides = [1, 1]} : vector<16x32xf32> to vector<16x8xf32>
    %126 = vector.extract_strided_slice %65 {offsets = [0, 16], sizes = [16, 8], strides = [1, 1]} : vector<16x32xf32> to vector<16x8xf32>
    %cst_54 = arith.constant dense<0.000000e+00> : vector<16x16xf32>
    %127 = tpu.matmul %125, %126, %cst_54 {dimension_numbers = #tpu.dot_dimension_numbers<[1], [1], [0], [0], [0, 0, 1, 0], [], []>} : vector<16x8xf32>, vector<16x8xf32>, vector<16x16xf32> -> vector<16x16xf32>
    %128 = vector.shape_cast %127 : vector<16x16xf32> to vector<1x16x16xf32>
    %cst_55 = arith.constant dense<0xFF800000> : vector<1xf32>
    %129 = vector.multi_reduction <maximumf>, %128, %cst_55 [1, 2] : vector<1x16x16xf32> to vector<1xf32>
    %130 = vector.shape_cast %129 : vector<1xf32> to vector<1x1x1xf32>
    %131 = vector.extract %130[0, 0, 0] : f32 from vector<1x1x1xf32>
    %132 = vector.broadcast %131 : f32 to vector<1x1xf32>
    %133 = vector.broadcast %132 : vector<1x1xf32> to vector<16x16xf32>
    %134 = arith.subf %127, %133 : vector<16x16xf32>
    %135 = math.exp %134 : vector<16x16xf32>
    %cst_56 = arith.constant dense<0.000000e+00> : vector<16xf32>
    %136 = vector.multi_reduction <add>, %135, %cst_56 [1] : vector<16x16xf32> to vector<16xf32>
    %137 = vector.shape_cast %136 : vector<16xf32> to vector<16x1xf32>
    %138 = tpu.reciprocal %137 {approx = true} : vector<16x1xf32> -> vector<16x1xf32>
    %cst_57 = arith.constant dense<0.000000e+00> : vector<16xf32>
    %139 = vector.multi_reduction <add>, %135, %cst_57 [0] : vector<16x16xf32> to vector<16xf32>
    %140 = vector.shape_cast %139 : vector<16xf32> to vector<1x16xf32>
    %141 = tpu.reciprocal %140 {approx = true} : vector<1x16xf32> -> vector<1x16xf32>
    %142 = vector.extract_strided_slice %64 {offsets = [0, 16], sizes = [16, 8], strides = [1, 1]} : vector<16x32xf32> to vector<16x8xf32>
    %cst_58 = arith.constant dense<0.000000e+00> : vector<16x8xf32>
    %143 = tpu.matmul %135, %142, %cst_58 {dimension_numbers = #tpu.dot_dimension_numbers<[1], [0], [0], [1], [0, 0, 1, 1], [], []>} : vector<16x16xf32>, vector<16x8xf32>, vector<16x8xf32> -> vector<16x8xf32>
    %144 = vector.broadcast %138 : vector<16x1xf32> to vector<16x8xf32>
    %145 = arith.mulf %144, %143 : vector<16x8xf32>
    %c0_59 = arith.constant 0 : index
    %c16 = arith.constant 16 : index
    %146 = vector.load %arg15[%c0_59, %c16] : memref<16x32xf32, #tpu.memory_space<vmem>>, vector<16x8xf32>
    tpu.vector_store %arg15[%c0_59, %c16], %145 {strides = array<i32>} : memref<16x32xf32, #tpu.memory_space<vmem>>, vector<16x8xf32>,
    %147 = vector.extract_strided_slice %66 {offsets = [0, 16], sizes = [16, 8], strides = [1, 1]} : vector<16x32xf32> to vector<16x8xf32>
    %cst_60 = arith.constant dense<0.000000e+00> : vector<8x16xf32>
    %148 = tpu.matmul %147, %135, %cst_60 {dimension_numbers = #tpu.dot_dimension_numbers<[0], [0], [1], [1], [0, 1, 1, 1], [], []>} : vector<16x8xf32>, vector<16x16xf32>, vector<8x16xf32> -> vector<8x16xf32>
    %149 = vector.broadcast %141 : vector<1x16xf32> to vector<8x16xf32>
    %150 = arith.mulf %148, %149 : vector<8x16xf32>
    %c0_61 = arith.constant 0 : index
    %c16_62 = arith.constant 16 : index
    %c0_63 = arith.constant 0 : index
    %151 = vector.load %arg14[%c0_61, %c16_62, %c0_63] : memref<1x32x16xf32, #tpu.memory_space<vmem>>, vector<1x8x16xf32>
    %152 = vector.shape_cast %151 : vector<1x8x16xf32> to vector<8x16xf32>
    %153 = vector.shape_cast %150 : vector<8x16xf32> to vector<1x8x16xf32>
    tpu.vector_store %arg14[%c0_61, %c16_62, %c0_63], %153 {strides = array<i32>} : memref<1x32x16xf32, #tpu.memory_space<vmem>>, vector<1x8x16xf32>,
    %154 = vector.extract_strided_slice %58 {offsets = [0, 24], sizes = [16, 8], strides = [1, 1]} : vector<16x32xf32> to vector<16x8xf32>
    %155 = vector.extract_strided_slice %65 {offsets = [0, 24], sizes = [16, 8], strides = [1, 1]} : vector<16x32xf32> to vector<16x8xf32>
    %cst_64 = arith.constant dense<0.000000e+00> : vector<16x16xf32>
    %156 = tpu.matmul %154, %155, %cst_64 {dimension_numbers = #tpu.dot_dimension_numbers<[1], [1], [0], [0], [0, 0, 1, 0], [], []>} : vector<16x8xf32>, vector<16x8xf32>, vector<16x16xf32> -> vector<16x16xf32>
    %157 = vector.shape_cast %156 : vector<16x16xf32> to vector<1x16x16xf32>
    %cst_65 = arith.constant dense<0xFF800000> : vector<1xf32>
    %158 = vector.multi_reduction <maximumf>, %157, %cst_65 [1, 2] : vector<1x16x16xf32> to vector<1xf32>
    %159 = vector.shape_cast %158 : vector<1xf32> to vector<1x1x1xf32>
    %160 = vector.extract %159[0, 0, 0] : f32 from vector<1x1x1xf32>
    %161 = vector.broadcast %160 : f32 to vector<1x1xf32>
    %162 = vector.broadcast %161 : vector<1x1xf32> to vector<16x16xf32>
    %163 = arith.subf %156, %162 : vector<16x16xf32>
    %164 = math.exp %163 : vector<16x16xf32>
    %cst_66 = arith.constant dense<0.000000e+00> : vector<16xf32>
    %165 = vector.multi_reduction <add>, %164, %cst_66 [1] : vector<16x16xf32> to vector<16xf32>
    %166 = vector.shape_cast %165 : vector<16xf32> to vector<16x1xf32>
    %167 = tpu.reciprocal %166 {approx = true} : vector<16x1xf32> -> vector<16x1xf32>
    %cst_67 = arith.constant dense<0.000000e+00> : vector<16xf32>
    %168 = vector.multi_reduction <add>, %164, %cst_67 [0] : vector<16x16xf32> to vector<16xf32>
    %169 = vector.shape_cast %168 : vector<16xf32> to vector<1x16xf32>
    %170 = tpu.reciprocal %169 {approx = true} : vector<1x16xf32> -> vector<1x16xf32>
    %171 = vector.extract_strided_slice %64 {offsets = [0, 24], sizes = [16, 8], strides = [1, 1]} : vector<16x32xf32> to vector<16x8xf32>
    %cst_68 = arith.constant dense<0.000000e+00> : vector<16x8xf32>
    %172 = tpu.matmul %164, %171, %cst_68 {dimension_numbers = #tpu.dot_dimension_numbers<[1], [0], [0], [1], [0, 0, 1, 1], [], []>} : vector<16x16xf32>, vector<16x8xf32>, vector<16x8xf32> -> vector<16x8xf32>
    %173 = vector.broadcast %167 : vector<16x1xf32> to vector<16x8xf32>
    %174 = arith.mulf %173, %172 : vector<16x8xf32>
    %c0_69 = arith.constant 0 : index
    %c24 = arith.constant 24 : index
    %175 = vector.load %arg15[%c0_69, %c24] : memref<16x32xf32, #tpu.memory_space<vmem>>, vector<16x8xf32>
    tpu.vector_store %arg15[%c0_69, %c24], %174 {strides = array<i32>} : memref<16x32xf32, #tpu.memory_space<vmem>>, vector<16x8xf32>,
    %176 = vector.extract_strided_slice %66 {offsets = [0, 24], sizes = [16, 8], strides = [1, 1]} : vector<16x32xf32> to vector<16x8xf32>
    %cst_70 = arith.constant dense<0.000000e+00> : vector<8x16xf32>
    %177 = tpu.matmul %176, %164, %cst_70 {dimension_numbers = #tpu.dot_dimension_numbers<[0], [0], [1], [1], [0, 1, 1, 1], [], []>} : vector<16x8xf32>, vector<16x16xf32>, vector<8x16xf32> -> vector<8x16xf32>
    %178 = vector.broadcast %170 : vector<1x16xf32> to vector<8x16xf32>
    %179 = arith.mulf %177, %178 : vector<8x16xf32>
    %c0_71 = arith.constant 0 : index
    %c24_72 = arith.constant 24 : index
    %c0_73 = arith.constant 0 : index
    %180 = vector.load %arg14[%c0_71, %c24_72, %c0_73] : memref<1x32x16xf32, #tpu.memory_space<vmem>>, vector<1x8x16xf32>
    %181 = vector.shape_cast %180 : vector<1x8x16xf32> to vector<8x16xf32>
    %182 = vector.shape_cast %179 : vector<8x16xf32> to vector<1x8x16xf32>
    tpu.vector_store %arg14[%c0_71, %c24_72, %c0_73], %182 {strides = array<i32>} : memref<1x32x16xf32, #tpu.memory_space<vmem>>, vector<1x8x16xf32>,
    %c0_74 = arith.constant 0 : index
    %c0_75 = arith.constant 0 : index
    %183 = vector.load %arg15[%c0_74, %c0_75] : memref<16x32xf32, #tpu.memory_space<vmem>>, vector<16x32xf32>
    %c0_76 = arith.constant 0 : index
    %c0_77 = arith.constant 0 : index
    %184 = vector.load %arg11[%c0_76, %c0_77] : memref<32x32xf32, #tpu.memory_space<vmem>>, vector<32x32xf32>
    %cst_78 = arith.constant dense<0.000000e+00> : vector<16x32xf32>
    %185 = tpu.matmul %183, %184, %cst_78 {dimension_numbers = #tpu.dot_dimension_numbers<[1], [0], [0], [1], [0, 0, 1, 1], [], []>} : vector<16x32xf32>, vector<32x32xf32>, vector<16x32xf32> -> vector<16x32xf32>
    %c0_79 = arith.constant 0 : index
    %c0_80 = arith.constant 0 : index
    %186 = vector.load %arg12[%c0_79, %c0_80] : memref<1x32xf32, #tpu.memory_space<vmem>>, vector<1x32xf32>
    %187 = vector.broadcast %186 : vector<1x32xf32> to vector<16x32xf32>
    %188 = arith.addf %185, %187 : vector<16x32xf32>
    %c0_81 = arith.constant 0 : index
    %c0_82 = arith.constant 0 : index
    %c0_83 = arith.constant 0 : index
    %189 = vector.load %arg13[%c0_81, %c0_82, %c0_83] : memref<1x16x32xf32, #tpu.memory_space<vmem>>, vector<1x16x32xf32>
    %190 = vector.shape_cast %189 : vector<1x16x32xf32> to vector<16x32xf32>
    %191 = vector.shape_cast %188 : vector<16x32xf32> to vector<1x16x32xf32>
    tpu.vector_store %arg13[%c0_81, %c0_82, %c0_83], %191 {strides = array<i32>} : memref<1x16x32xf32, #tpu.memory_space<vmem>>, vector<1x16x32xf32>,
    return
  }
  func.func @transform_0(%arg0: i32) -> (i32, i32, i32) {
    %c0_i32 = arith.constant 0 : i32
    %c0_i32_0 = arith.constant 0 : i32
    %c0_i32_1 = arith.constant 0 : i32
    return %arg0, %c0_i32, %c0_i32_0 : i32, i32, i32
  }
  func.func @transform_1(%arg0: i32) -> (i32, i32, i32) {
    %c0_i32 = arith.constant 0 : i32
    %c0_i32_0 = arith.constant 0 : i32
    %c0_i32_1 = arith.constant 0 : i32
    return %arg0, %c0_i32, %c0_i32_0 : i32, i32, i32
  }
  func.func @transform_2(%arg0: i32) -> (i32, i32) {
    %c0_i32 = arith.constant 0 : i32
    %c0_i32_0 = arith.constant 0 : i32
    %c0_i32_1 = arith.constant 0 : i32
    return %c0_i32, %c0_i32_0 : i32, i32
  }
  func.func @transform_3(%arg0: i32) -> (i32, i32) {
    %c0_i32 = arith.constant 0 : i32
    %c0_i32_0 = arith.constant 0 : i32
    %c0_i32_1 = arith.constant 0 : i32
    return %c0_i32, %c0_i32_0 : i32, i32
  }
  func.func @transform_4(%arg0: i32) -> (i32, i32) {
    %c0_i32 = arith.constant 0 : i32
    %c0_i32_0 = arith.constant 0 : i32
    %c0_i32_1 = arith.constant 0 : i32
    return %c0_i32, %c0_i32_0 : i32, i32
  }
  func.func @transform_5(%arg0: i32) -> (i32, i32) {
    %c0_i32 = arith.constant 0 : i32
    %c0_i32_0 = arith.constant 0 : i32
    %c0_i32_1 = arith.constant 0 : i32
    return %c0_i32, %c0_i32_0 : i32, i32
  }
  func.func @transform_6(%arg0: i32) -> (i32, i32) {
    %c0_i32 = arith.constant 0 : i32
    %c0_i32_0 = arith.constant 0 : i32
    %c0_i32_1 = arith.constant 0 : i32
    return %c0_i32, %c0_i32_0 : i32, i32
  }
  func.func @transform_7(%arg0: i32) -> (i32, i32) {
    %c0_i32 = arith.constant 0 : i32
    %c0_i32_0 = arith.constant 0 : i32
    %c0_i32_1 = arith.constant 0 : i32
    return %c0_i32, %c0_i32_0 : i32, i32
  }
  func.func @transform_8(%arg0: i32) -> (i32, i32) {
    %c0_i32 = arith.constant 0 : i32
    %c0_i32_0 = arith.constant 0 : i32
    %c0_i32_1 = arith.constant 0 : i32
    return %c0_i32, %c0_i32_0 : i32, i32
  }
  func.func @transform_9(%arg0: i32) -> (i32, i32) {
    %c0_i32 = arith.constant 0 : i32
    %c0_i32_0 = arith.constant 0 : i32
    %c0_i32_1 = arith.constant 0 : i32
    return %c0_i32, %c0_i32_0 : i32, i32
  }
  func.func @transform_10(%arg0: i32) -> (i32, i32) {
    %c0_i32 = arith.constant 0 : i32
    %c0_i32_0 = arith.constant 0 : i32
    %c0_i32_1 = arith.constant 0 : i32
    return %c0_i32, %c0_i32_0 : i32, i32
  }
  func.func @transform_11(%arg0: i32) -> (i32, i32) {
    %c0_i32 = arith.constant 0 : i32
    %c0_i32_0 = arith.constant 0 : i32
    %c0_i32_1 = arith.constant 0 : i32
    return %c0_i32, %c0_i32_0 : i32, i32
  }
  func.func @transform_12(%arg0: i32) -> (i32, i32, i32) {
    %c0_i32 = arith.constant 0 : i32
    %c0_i32_0 = arith.constant 0 : i32
    %c0_i32_1 = arith.constant 0 : i32
    return %arg0, %c0_i32, %c0_i32_0 : i32, i32, i32
  }
  func.func @transform_13(%arg0: i32) -> (i32, i32, i32) {
    %c0_i32 = arith.constant 0 : i32
    %c0_i32_0 = arith.constant 0 : i32
    %c0_i32_1 = arith.constant 0 : i32
    return %arg0, %c0_i32, %c0_i32_0 : i32, i32, i32
  }
}

</mosaic_0001>

<llo_original>
// kernel: tpu_custom_call.1
$region0: #{tpu_custom_call.1}
  #allocation0 [shape = 'u32[]', space=smem, size = 0x4, offset = 0x4, fixed_abs, tag = 'smem constant byte address 0x4 - core index']
  #allocation1 [shape = 'u32[144,128]{1,0:T(1,128)}', space=vmem, size = 0x12000, scoped, tag = 'internal scratch']
  #allocation2 [shape = 'f32[16,32]{1,0:T(8,128)}', space=vmem, size = 0x2000, scoped, tag = 'scratch operand']
  %s0 = inlined_call_operand.hbm [shape: f32[2,16,32], index: 0, kind: input, shape index: {}]
  %s1 = inlined_call_operand.hbm [shape: f32[2,16,32], index: 1, kind: input, shape index: {}]
  %s2 = inlined_call_operand.vmem [shape: f32[1,32], index: 2, kind: input, shape index: {}]
  %s3 = inlined_call_operand.vmem [shape: f32[1,32], index: 3, kind: input, shape index: {}]
  %s4 = inlined_call_operand.vmem [shape: f32[1,32], index: 4, kind: input, shape index: {}]
  %s5 = inlined_call_operand.vmem [shape: f32[1,32], index: 5, kind: input, shape index: {}]
  %s6 = inlined_call_operand.hbm [shape: f32[32,32], index: 6, kind: input, shape index: {}]
  %s7 = inlined_call_operand.vmem [shape: f32[1,32], index: 7, kind: input, shape index: {}]
  %s8 = inlined_call_operand.hbm [shape: f32[32,96], index: 8, kind: input, shape index: {}]
  %s9 = inlined_call_operand.hbm [shape: f32[1,96], index: 9, kind: input, shape index: {}]
  %s10 = inlined_call_operand.vmem [shape: f32[32,32], index: 10, kind: input, shape index: {}]
  %s11 = inlined_call_operand.vmem [shape: f32[1,32], index: 11, kind: input, shape index: {}]
  %s12 = inlined_call_operand.hbm [shape: f32[2,16,32], index: 12, kind: output, shape index: {0}]
  %s13 = inlined_call_operand.vmem [shape: f32[2,32,16], index: 13, kind: output, shape index: {1}]
  %14 = xla_tuple %s12, %s13
  %s15 = sld [smem:[#allocation0]]
  $region109: #{tpu_custom_call.1} parent=0
    _
  %s17 = ssub.s32 1, %s15
  %s18 = scalar_select 0, %s17, %s15
  $region1: #{tpu_custom_call.1} parent=0
    #allocation3 [shape = 'u8[16384]{0}', space=vmem, size = 0x4000, scoped, tag = 'input window, operand 0']
    #allocation4 [shape = 's32[2]{0}', space=sflag, size = 0x8, scoped, tag = 'scoped memory for tpu_custom_call.1']
    #allocation5 [shape = 's32[2]{0}', space=sflag, size = 0x8, scoped, tag = 'scoped memory for tpu_custom_call.1']
    #allocation6 [shape = 'u8[16384]{0}', space=vmem, size = 0x4000, scoped, tag = 'input window, operand 1']
    #allocation7 [shape = 's32[2]{0}', space=sflag, size = 0x8, scoped, tag = 'scoped memory for tpu_custom_call.1']
    #allocation8 [shape = 'u8[16384]{0}', space=vmem, size = 0x4000, scoped, tag = 'input window, operand 6, single buffered']
    #allocation9 [shape = 'u8[16384]{0}', space=vmem, size = 0x4000, scoped, tag = 'input window, operand 8, single buffered']
    #allocation10 [shape = 's32[1]{0}', space=sflag, size = 0x4, scoped, tag = 'scoped memory for tpu_custom_call.1']
    #allocation11 [shape = 'u8[512]{0}', space=vmem, size = 0x400, scoped, tag = 'input window, operand 9, single buffered']
    #allocation12 [shape = 'u8[16384]{0}', space=vmem, size = 0x4000, scoped, tag = 'output window, operand 0']
    %19 = vsyncpa [#allocation4], 0
    %s20 = scalar_lea.sflag [#allocation4], 1
    %21 = vsyncpa %s20, 0
    %22 = vsyncpa [#allocation7], 0
    %s23 = scalar_lea.sflag [#allocation7], 1
    %24 = vsyncpa %s23, 0
    %25 = vsyncpa [#allocation10], 0
    %26 = vsyncpa [#allocation5], 0
    %s27 = scalar_lea.sflag [#allocation5], 1
    %28 = vsyncpa %s27, 0
    loop: start=0, step=1, limit=4
    $region2: #{tpu_custom_call.1} parent=1 // loop_pre_header
      _
    $region3: #{tpu_custom_call.1} parent=1 // loop_header
      %s30 = sphi 0, %s34
      %p31 = scmp.ge.s32.totalorder %s30, 4
      %s40 = sphi 0, %s42
      %s43 = sphi 0, %s40
      %s44 = sphi 0, %s43
      %s60 = sphi 0, %s44
      %s66 = sphi 0, %s68
      %s69 = sphi 0, %s66
      %s70 = sphi 0, %s69
      %s86 = sphi 0, %s70
      %s90 = sphi 0, %s90
      %s92 = sphi 0, %s90
      %s93 = sphi 0, %s92
      %s107 = sphi 0, %s93
      %s111 = sphi 0, %s111
      %s113 = sphi 0, %s111
      %s114 = sphi 0, %s113
      %s128 = sphi 0, %s114
      %s132 = sphi 0, %s132
      %s134 = sphi 0, %s132
      %s135 = sphi 0, %s134
      %s149 = sphi 0, %s135
      %s153 = sphi 0, %s153
      %s155 = sphi 0, %s153
      %s156 = sphi 0, %s155
      %s170 = sphi 0, %s156
      %s174 = sphi 0, %s174
      %s176 = sphi 0, %s174
      %s177 = sphi 0, %s176
      %s191 = sphi 0, %s177
      %s195 = sphi 0, %s195
      %s197 = sphi 0, %s195
      %s198 = sphi 0, %s197
      %s212 = sphi 0, %s198
      %s216 = sphi 0, %s216
      %s218 = sphi 0, %s216
      %s219 = sphi 0, %s218
      %s233 = sphi 0, %s219
      %s237 = sphi 0, %s237
      %s239 = sphi 0, %s237
      %s240 = sphi 0, %s239
      %s254 = sphi 0, %s240
      %s258 = sphi 0, %s258
      %s260 = sphi 0, %s258
      %s261 = sphi 0, %s260
      %s275 = sphi 0, %s261
      %s279 = sphi 0, %s279
      %s281 = sphi 0, %s279
      %s282 = sphi 0, %s281
      %s296 = sphi 0, %s282
      %s302 = sphi 0, %s304
      %s305 = sphi 0, %s302
      %s306 = sphi 0, %s305
      %s322 = sphi 0, %s306
      %s328 = sphi 0, %s330
      %s331 = sphi 0, %s328
      %s332 = sphi 0, %s331
      %s348 = sphi 0, %s332
    $region4: #{tpu_custom_call.1} parent=1 // loop_header_branch
      %33 = sbr.rel (%p31) target = $region8
    $region5: #{tpu_custom_call.1} parent=1 // loop_body
      %s35 = ssub.s32 %s30, 1
      %s36 = ssub.s32 %s30, 2
      %s37 = sadd.s32 %s30, 1
      %s38 = ssub.s32 %s30, %s37
      %p39 = scmp.eq.s32.totalorder %s38, 0
      %s41 = sadd.s32 %s40, 1
      %s42 = scalar_select %p39, %s40, %s41
      %p45 = pneg %p39
      %p46 = scmp.eq.s32.totalorder %s30, 1
      %p47 = por %p45, %p46
      %p48 = scmp.ne.s32.totalorder %s40, %s43
      %p49 = scmp.eq.s32.totalorder %s30, 0
      %p50 = por %p48, %p49
      %p51 = scmp.ne.s32.totalorder %s40, %s43
      %p52 = scmp.eq.s32.totalorder %s35, 1
      %p53 = por %p51, %p52
      %p54 = scmp.ne.s32.totalorder %s43, %s44
      %p55 = scmp.eq.s32.totalorder %s35, 0
      %p56 = por %p54, %p55
      %p57 = scmp.ne.s32.totalorder %s43, %s44
      %p58 = scmp.eq.s32.totalorder %s36, 1
      %p59 = por %p57, %p58
      %p61 = scmp.ne.s32.totalorder %s44, %s60
      %p62 = scmp.eq.s32.totalorder %s36, 0
      %p63 = por %p61, %p62
      %s64 = ssub.s32 %s30, %s37
      %p65 = scmp.eq.s32.totalorder %s64, 0
      %s67 = sadd.s32 %s66, 1
      %s68 = scalar_select %p65, %s66, %s67
      %p71 = pneg %p65
      %p72 = scmp.eq.s32.totalorder %s30, 1
      %p73 = por %p71, %p72
      %p74 = scmp.ne.s32.totalorder %s66, %s69
      %p75 = scmp.eq.s32.totalorder %s30, 0
      %p76 = por %p74, %p75
      %p77 = scmp.ne.s32.totalorder %s66, %s69
      %p78 = scmp.eq.s32.totalorder %s35, 1
      %p79 = por %p77, %p78
      %p80 = scmp.ne.s32.totalorder %s69, %s70
      %p81 = scmp.eq.s32.totalorder %s35, 0
      %p82 = por %p80, %p81
      %p83 = scmp.ne.s32.totalorder %s69, %s70
      %p84 = scmp.eq.s32.totalorder %s36, 1
      %p85 = por %p83, %p84
      %p87 = scmp.ne.s32.totalorder %s70, %s86
      %p88 = scmp.eq.s32.totalorder %s36, 0
      %p89 = por %p87, %p88
      %s91 = sadd.s32 %s90, 1
      %p94 = scmp.eq.s32.totalorder %s30, 1
      %p95 = scmp.ne.s32.totalorder %s90, %s92
      %p96 = scmp.eq.s32.totalorder %s30, 0
      %p97 = por %p95, %p96
      %p98 = scmp.ne.s32.totalorder %s90, %s92
      %p99 = scmp.eq.s32.totalorder %s35, 1
      %p100 = por %p98, %p99
      %p101 = scmp.ne.s32.totalorder %s92, %s93
      %p102 = scmp.eq.s32.totalorder %s35, 0
      %p103 = por %p101, %p102
      %p104 = scmp.ne.s32.totalorder %s92, %s93
      %p105 = scmp.eq.s32.totalorder %s36, 1
      %p106 = por %p104, %p105
      %p108 = scmp.ne.s32.totalorder %s93, %s107
      %p109 = scmp.eq.s32.totalorder %s36, 0
      %p110 = por %p108, %p109
      %s112 = sadd.s32 %s111, 1
      %p115 = scmp.eq.s32.totalorder %s30, 1
      %p116 = scmp.ne.s32.totalorder %s111, %s113
      %p117 = scmp.eq.s32.totalorder %s30, 0
      %p118 = por %p116, %p117
      %p119 = scmp.ne.s32.totalorder %s111, %s113
      %p120 = scmp.eq.s32.totalorder %s35, 1
      %p121 = por %p119, %p120
      %p122 = scmp.ne.s32.totalorder %s113, %s114
      %p123 = scmp.eq.s32.totalorder %s35, 0
      %p124 = por %p122, %p123
      %p125 = scmp.ne.s32.totalorder %s113, %s114
      %p126 = scmp.eq.s32.totalorder %s36, 1
      %p127 = por %p125, %p126
      %p129 = scmp.ne.s32.totalorder %s114, %s128
      %p130 = scmp.eq.s32.totalorder %s36, 0
      %p131 = por %p129, %p130
      %s133 = sadd.s32 %s132, 1
      %p136 = scmp.eq.s32.totalorder %s30, 1
      %p137 = scmp.ne.s32.totalorder %s132, %s134
      %p138 = scmp.eq.s32.totalorder %s30, 0
      %p139 = por %p137, %p138
      %p140 = scmp.ne.s32.totalorder %s132, %s134
      %p141 = scmp.eq.s32.totalorder %s35, 1
      %p142 = por %p140, %p141
      %p143 = scmp.ne.s32.totalorder %s134, %s135
      %p144 = scmp.eq.s32.totalorder %s35, 0
      %p145 = por %p143, %p144
      %p146 = scmp.ne.s32.totalorder %s134, %s135
      %p147 = scmp.eq.s32.totalorder %s36, 1
      %p148 = por %p146, %p147
      %p150 = scmp.ne.s32.totalorder %s135, %s149
      %p151 = scmp.eq.s32.totalorder %s36, 0
      %p152 = por %p150, %p151
      %s154 = sadd.s32 %s153, 1
      %p157 = scmp.eq.s32.totalorder %s30, 1
      %p158 = scmp.ne.s32.totalorder %s153, %s155
      %p159 = scmp.eq.s32.totalorder %s30, 0
      %p160 = por %p158, %p159
      %p161 = scmp.ne.s32.totalorder %s153, %s155
      %p162 = scmp.eq.s32.totalorder %s35, 1
      %p163 = por %p161, %p162
      %p164 = scmp.ne.s32.totalorder %s155, %s156
      %p165 = scmp.eq.s32.totalorder %s35, 0
      %p166 = por %p164, %p165
      %p167 = scmp.ne.s32.totalorder %s155, %s156
      %p168 = scmp.eq.s32.totalorder %s36, 1
      %p169 = por %p167, %p168
      %p171 = scmp.ne.s32.totalorder %s156, %s170
      %p172 = scmp.eq.s32.totalorder %s36, 0
      %p173 = por %p171, %p172
      %s175 = sadd.s32 %s174, 1
      %p178 = scmp.eq.s32.totalorder %s30, 1
      %p179 = scmp.ne.s32.totalorder %s174, %s176
      %p180 = scmp.eq.s32.totalorder %s30, 0
      %p181 = por %p179, %p180
      %p182 = scmp.ne.s32.totalorder %s174, %s176
      %p183 = scmp.eq.s32.totalorder %s35, 1
      %p184 = por %p182, %p183
      %p185 = scmp.ne.s32.totalorder %s176, %s177
      %p186 = scmp.eq.s32.totalorder %s35, 0
      %p187 = por %p185, %p186
      %p188 = scmp.ne.s32.totalorder %s176, %s177
      %p189 = scmp.eq.s32.totalorder %s36, 1
      %p190 = por %p188, %p189
      %p192 = scmp.ne.s32.totalorder %s177, %s191
      %p193 = scmp.eq.s32.totalorder %s36, 0
      %p194 = por %p192, %p193
      %s196 = sadd.s32 %s195, 1
      %p199 = scmp.eq.s32.totalorder %s30, 1
      %p200 = scmp.ne.s32.totalorder %s195, %s197
      %p201 = scmp.eq.s32.totalorder %s30, 0
      %p202 = por %p200, %p201
      %p203 = scmp.ne.s32.totalorder %s195, %s197
      %p204 = scmp.eq.s32.totalorder %s35, 1
      %p205 = por %p203, %p204
      %p206 = scmp.ne.s32.totalorder %s197, %s198
      %p207 = scmp.eq.s32.totalorder %s35, 0
      %p208 = por %p206, %p207
      %p209 = scmp.ne.s32.totalorder %s197, %s198
      %p210 = scmp.eq.s32.totalorder %s36, 1
      %p211 = por %p209, %p210
      %p213 = scmp.ne.s32.totalorder %s198, %s212
      %p214 = scmp.eq.s32.totalorder %s36, 0
      %p215 = por %p213, %p214
      %s217 = sadd.s32 %s216, 1
      %p220 = scmp.eq.s32.totalorder %s30, 1
      %p221 = scmp.ne.s32.totalorder %s216, %s218
      %p222 = scmp.eq.s32.totalorder %s30, 0
      %p223 = por %p221, %p222
      %p224 = scmp.ne.s32.totalorder %s216, %s218
      %p225 = scmp.eq.s32.totalorder %s35, 1
      %p226 = por %p224, %p225
      %p227 = scmp.ne.s32.totalorder %s218, %s219
      %p228 = scmp.eq.s32.totalorder %s35, 0
      %p229 = por %p227, %p228
      %p230 = scmp.ne.s32.totalorder %s218, %s219
      %p231 = scmp.eq.s32.totalorder %s36, 1
      %p232 = por %p230, %p231
      %p234 = scmp.ne.s32.totalorder %s219, %s233
      %p235 = scmp.eq.s32.totalorder %s36, 0
      %p236 = por %p234, %p235
      %s238 = sadd.s32 %s237, 1
      %p241 = scmp.eq.s32.totalorder %s30, 1
      %p242 = scmp.ne.s32.totalorder %s237, %s239
      %p243 = scmp.eq.s32.totalorder %s30, 0
      %p244 = por %p242, %p243
      %p245 = scmp.ne.s32.totalorder %s237, %s239
      %p246 = scmp.eq.s32.totalorder %s35, 1
      %p247 = por %p245, %p246
      %p248 = scmp.ne.s32.totalorder %s239, %s240
      %p249 = scmp.eq.s32.totalorder %s35, 0
      %p250 = por %p248, %p249
      %p251 = scmp.ne.s32.totalorder %s239, %s240
      %p252 = scmp.eq.s32.totalorder %s36, 1
      %p253 = por %p251, %p252
      %p255 = scmp.ne.s32.totalorder %s240, %s254
      %p256 = scmp.eq.s32.totalorder %s36, 0
      %p257 = por %p255, %p256
      %s259 = sadd.s32 %s258, 1
      %p262 = scmp.eq.s32.totalorder %s30, 1
      %p263 = scmp.ne.s32.totalorder %s258, %s260
      %p264 = scmp.eq.s32.totalorder %s30, 0
      %p265 = por %p263, %p264
      %p266 = scmp.ne.s32.totalorder %s258, %s260
      %p267 = scmp.eq.s32.totalorder %s35, 1
      %p268 = por %p266, %p267
      %p269 = scmp.ne.s32.totalorder %s260, %s261
      %p270 = scmp.eq.s32.totalorder %s35, 0
      %p271 = por %p269, %p270
      %p272 = scmp.ne.s32.totalorder %s260, %s261
      %p273 = scmp.eq.s32.totalorder %s36, 1
      %p274 = por %p272, %p273
      %p276 = scmp.ne.s32.totalorder %s261, %s275
      %p277 = scmp.eq.s32.totalorder %s36, 0
      %p278 = por %p276, %p277
      %s280 = sadd.s32 %s279, 1
      %p283 = scmp.eq.s32.totalorder %s30, 1
      %p284 = scmp.ne.s32.totalorder %s279, %s281
      %p285 = scmp.eq.s32.totalorder %s30, 0
      %p286 = por %p284, %p285
      %p287 = scmp.ne.s32.totalorder %s279, %s281
      %p288 = scmp.eq.s32.totalorder %s35, 1
      %p289 = por %p287, %p288
      %p290 = scmp.ne.s32.totalorder %s281, %s282
      %p291 = scmp.eq.s32.totalorder %s35, 0
      %p292 = por %p290, %p291
      %p293 = scmp.ne.s32.totalorder %s281, %s282
      %p294 = scmp.eq.s32.totalorder %s36, 1
      %p295 = por %p293, %p294
      %p297 = scmp.ne.s32.totalorder %s282, %s296
      %p298 = scmp.eq.s32.totalorder %s36, 0
      %p299 = por %p297, %p298
      %s300 = ssub.s32 %s30, %s37
      %p301 = scmp.eq.s32.totalorder %s300, 0
      %s303 = sadd.s32 %s302, 1
      %s304 = scalar_select %p301, %s302, %s303
      %p307 = pneg %p301
      %p308 = scmp.eq.s32.totalorder %s30, 1
      %p309 = por %p307, %p308
      %p310 = scmp.ne.s32.totalorder %s302, %s305
      %p311 = scmp.eq.s32.totalorder %s30, 0
      %p312 = por %p310, %p311
      %p313 = scmp.ne.s32.totalorder %s302, %s305
      %p314 = scmp.eq.s32.totalorder %s35, 1
      %p315 = por %p313, %p314
      %p316 = scmp.ne.s32.totalorder %s305, %s306
      %p317 = scmp.eq.s32.totalorder %s35, 0
      %p318 = por %p316, %p317
      %p319 = scmp.ne.s32.totalorder %s305, %s306
      %p320 = scmp.eq.s32.totalorder %s36, 1
      %p321 = por %p319, %p320
      %p323 = scmp.ne.s32.totalorder %s306, %s322
      %p324 = scmp.eq.s32.totalorder %s36, 0
      %p325 = por %p323, %p324
      %s326 = ssub.s32 %s30, %s37
      %p327 = scmp.eq.s32.totalorder %s326, 0
      %s329 = sadd.s32 %s328, 1
      %s330 = scalar_select %p327, %s328, %s329
      %p333 = pneg %p327
      %p334 = scmp.eq.s32.totalorder %s30, 1
      %p335 = por %p333, %p334
      %p336 = scmp.ne.s32.totalorder %s328, %s331
      %p337 = scmp.eq.s32.totalorder %s30, 0
      %p338 = por %p336, %p337
      %p339 = scmp.ne.s32.totalorder %s328, %s331
      %p340 = scmp.eq.s32.totalorder %s35, 1
      %p341 = por %p339, %p340
      %p342 = scmp.ne.s32.totalorder %s331, %s332
      %p343 = scmp.eq.s32.totalorder %s35, 0
      %p344 = por %p342, %p343
      %p345 = scmp.ne.s32.totalorder %s331, %s332
      %p346 = scmp.eq.s32.totalorder %s36, 1
      %p347 = por %p345, %p346
      %p349 = scmp.ne.s32.totalorder %s332, %s348
      %p350 = scmp.eq.s32.totalorder %s36, 0
      %p351 = por %p349, %p350
      %p352 = scmp.le.s32.totalorder 1, %s30
      %p353 = scmp.lt.s32.totalorder %s30, 3
      %p354 = pnand %p352, %p353
      %p355 = pneg %p354
      // Predicated region
      $region9: #{tpu_custom_call.1} parent=5 // pred_check
        _
      $region10: #{tpu_custom_call.1} parent=5 // pred_check_branch
        %357 = sbr.rel (%p354) target = $region12
      $region11: #{tpu_custom_call.1} parent=5 // pred_region
        %s358 = ssub.s32 %s30, 1
        // Predicated region
        $region13: #{tpu_custom_call.1} parent=11 // pred_check
          %p359 = pneg %p103
        $region14: #{tpu_custom_call.1} parent=11 // pred_check_branch
          %361 = sbr.rel (%p359) target = $region16
        $region15: #{tpu_custom_call.1} parent=11 // pred_region
          _
        $region16: #{tpu_custom_call.1} parent=11 // pred_fallthru
          _
        // Predicated region
        $region17: #{tpu_custom_call.1} parent=11 // pred_check
          %p362 = pneg %p124
        $region18: #{tpu_custom_call.1} parent=11 // pred_check_branch
          %364 = sbr.rel (%p362) target = $region20
        $region19: #{tpu_custom_call.1} parent=11 // pred_region
          _
        $region20: #{tpu_custom_call.1} parent=11 // pred_fallthru
          _
        // Predicated region
        $region21: #{tpu_custom_call.1} parent=11 // pred_check
          %p365 = pneg %p145
        $region22: #{tpu_custom_call.1} parent=11 // pred_check_branch
          %367 = sbr.rel (%p365) target = $region24
        $region23: #{tpu_custom_call.1} parent=11 // pred_region
          _
        $region24: #{tpu_custom_call.1} parent=11 // pred_fallthru
          _
        // Predicated region
        $region25: #{tpu_custom_call.1} parent=11 // pred_check
          %p368 = pneg %p166
        $region26: #{tpu_custom_call.1} parent=11 // pred_check_branch
          %370 = sbr.rel (%p368) target = $region28
        $region27: #{tpu_custom_call.1} parent=11 // pred_region
          _
        $region28: #{tpu_custom_call.1} parent=11 // pred_fallthru
          _
        // Predicated region
        $region29: #{tpu_custom_call.1} parent=11 // pred_check
          %p371 = pneg %p187
        $region30: #{tpu_custom_call.1} parent=11 // pred_check_branch
          %373 = sbr.rel (%p371) target = $region32
        $region31: #{tpu_custom_call.1} parent=11 // pred_region
          %s375 = ssub.s32 512, 512
          %376 = vsyncadd [#allocation7], %s375
          %s377 = sshll.u32 [#allocation8], 4
          %s378 = int_to_ptr.vmem [resolvable:$true] %s377
          %383 = dma.hbm_to_vmem [thread:$0]  %s6, 512, %s378, [#allocation7], 128, 128, 8
        $region32: #{tpu_custom_call.1} parent=11 // pred_fallthru
          _
        // Predicated region
        $region33: #{tpu_custom_call.1} parent=11 // pred_check
          %p384 = pneg %p208
        $region34: #{tpu_custom_call.1} parent=11 // pred_check_branch
          %386 = sbr.rel (%p384) target = $region36
        $region35: #{tpu_custom_call.1} parent=11 // pred_region
          _
        $region36: #{tpu_custom_call.1} parent=11 // pred_fallthru
          _
        // Predicated region
        $region37: #{tpu_custom_call.1} parent=11 // pred_check
          %p387 = pneg %p229
        $region38: #{tpu_custom_call.1} parent=11 // pred_check_branch
          %389 = sbr.rel (%p387) target = $region40
        $region39: #{tpu_custom_call.1} parent=11 // pred_region
          %s391 = ssub.s32 512, 512
          %392 = vsyncadd [#allocation10], %s391
          %s393 = sshll.u32 [#allocation9], 4
          %s394 = int_to_ptr.vmem [resolvable:$true] %s393
          %399 = dma.hbm_to_vmem [thread:$0]  %s8, 512, %s394, [#allocation10], 128, 128, 8
        $region40: #{tpu_custom_call.1} parent=11 // pred_fallthru
          _
        // Predicated region
        $region41: #{tpu_custom_call.1} parent=11 // pred_check
          %p400 = pneg %p250
        $region42: #{tpu_custom_call.1} parent=11 // pred_check_branch
          %402 = sbr.rel (%p400) target = $region44
        $region43: #{tpu_custom_call.1} parent=11 // pred_region
          %s404 = ssub.s32 16, 16
          %405 = vsyncadd [#allocation10], %s404
          %s407 = sshll.u32 [#allocation11], 4
          %s408 = int_to_ptr.vmem [resolvable:$true] %s407
          %410 = dma.hbm_to_vmem [thread:$0]  %s9, 16, %s408, [#allocation10]
        $region44: #{tpu_custom_call.1} parent=11 // pred_fallthru
          _
        // Predicated region
        $region45: #{tpu_custom_call.1} parent=11 // pred_check
          %p411 = pneg %p271
        $region46: #{tpu_custom_call.1} parent=11 // pred_check_branch
          %413 = sbr.rel (%p411) target = $region48
        $region47: #{tpu_custom_call.1} parent=11 // pred_region
          _
        $region48: #{tpu_custom_call.1} parent=11 // pred_fallthru
          _
        // Predicated region
        $region49: #{tpu_custom_call.1} parent=11 // pred_check
          %p414 = pneg %p292
        $region50: #{tpu_custom_call.1} parent=11 // pred_check_branch
          %416 = sbr.rel (%p414) target = $region52
        $region51: #{tpu_custom_call.1} parent=11 // pred_region
          _
        $region52: #{tpu_custom_call.1} parent=11 // pred_fallthru
          _
      $region12: #{tpu_custom_call.1} parent=5 // pred_fallthru
        _
      %p417 = scmp.lt.s32.totalorder %s30, 2
      // Predicated region
      $region53: #{tpu_custom_call.1} parent=5 // pred_check
        %p418 = pneg %p417
      $region54: #{tpu_custom_call.1} parent=5 // pred_check_branch
        %420 = sbr.rel (%p418) target = $region56
      $region55: #{tpu_custom_call.1} parent=5 // pred_region
        // Predicated region
        $region57: #{tpu_custom_call.1} parent=55 // pred_check
          %p421 = pneg %p50
        $region58: #{tpu_custom_call.1} parent=55 // pred_check_branch
          %423 = sbr.rel (%p421) target = $region60
        $region59: #{tpu_custom_call.1} parent=55 // pred_region
          %s424 = sand.u32 %s40, 1
          %s425 = scalar_lea.sflag [#allocation4], %s424
          %s426 = sand.u32 %s40, 1
          %s427 = smul.addr %s426, 16
          %s428 = scalar_lea.vmem [#allocation3], %s427
          %s430 = ssub.s32 256, 256
          %431 = vsyncadd %s425, %s430
          %s432 = smul.addr %s30, 2
          %s433 = smul.addr %s432, 128
          %s434 = scalar_lea.hbm %s0, %s433
          %s435 = sshll.u32 %s428, 4
          %s436 = int_to_ptr.vmem [resolvable:$true] %s435
          %441 = dma.hbm_to_vmem [thread:$0]  %s434, 256, %s436, %s425, 128, 128, 8
        $region60: #{tpu_custom_call.1} parent=55 // pred_fallthru
          _
        // Predicated region
        $region61: #{tpu_custom_call.1} parent=55 // pred_check
          %p442 = pneg %p76
        $region62: #{tpu_custom_call.1} parent=55 // pred_check_branch
          %444 = sbr.rel (%p442) target = $region64
        $region63: #{tpu_custom_call.1} parent=55 // pred_region
          %s445 = sand.u32 %s30, 1
          %s446 = scalar_lea.sflag [#allocation7], %s445
          %s447 = sand.u32 %s66, 1
          %s448 = smul.addr %s447, 16
          %s449 = scalar_lea.vmem [#allocation6], %s448
          %s451 = ssub.s32 256, 256
          %452 = vsyncadd %s446, %s451
          %s453 = smul.addr %s30, 2
          %s454 = smul.addr %s453, 128
          %s455 = scalar_lea.hbm %s1, %s454
          %s456 = sshll.u32 %s449, 4
          %s457 = int_to_ptr.vmem [resolvable:$true] %s456
          %462 = dma.hbm_to_vmem [thread:$0]  %s455, 256, %s457, %s446, 128, 128, 8
        $region64: #{tpu_custom_call.1} parent=55 // pred_fallthru
          _
      $region56: #{tpu_custom_call.1} parent=5 // pred_fallthru
        _
      %p463 = scmp.le.s32.totalorder 1, %s30
      %p464 = scmp.lt.s32.totalorder %s30, 3
      %p465 = pnand %p463, %p464
      %p466 = pneg %p465
      // Predicated region
      $region65: #{tpu_custom_call.1} parent=5 // pred_check
        _
      $region66: #{tpu_custom_call.1} parent=5 // pred_check_branch
        %468 = sbr.rel (%p465) target = $region68
      $region67: #{tpu_custom_call.1} parent=5 // pred_region
        %s469 = ssub.s32 %s30, 1
        %s470 = sand.u32 %s43, 1
        %s471 = scalar_lea.sflag [#allocation4], %s470
        %s472 = sand.u32 %s43, 1
        %s473 = smul.addr %s472, 16
        %s474 = scalar_lea.vmem [#allocation3], %s473
        // Predicated region
        $region69: #{tpu_custom_call.1} parent=67 // pred_check
          %p475 = pneg %p56
        $region70: #{tpu_custom_call.1} parent=67 // pred_check_branch
          %477 = sbr.rel (%p475) target = $region72
        $region71: #{tpu_custom_call.1} parent=67 // pred_region
          %478 = dma.done %s471, 256
        $region72: #{tpu_custom_call.1} parent=67 // pred_fallthru
          _
        %s479 = sand.u32 %s35, 1
        %s480 = scalar_lea.sflag [#allocation7], %s479
        %s481 = sand.u32 %s69, 1
        %s482 = smul.addr %s481, 16
        %s483 = scalar_lea.vmem [#allocation6], %s482
        // Predicated region
        $region73: #{tpu_custom_call.1} parent=67 // pred_check
          %p484 = pneg %p82
        $region74: #{tpu_custom_call.1} parent=67 // pred_check_branch
          %486 = sbr.rel (%p484) target = $region76
        $region75: #{tpu_custom_call.1} parent=67 // pred_region
          %487 = dma.done %s480, 256
        $region76: #{tpu_custom_call.1} parent=67 // pred_fallthru
          _
        // Predicated region
        $region77: #{tpu_custom_call.1} parent=67 // pred_check
          %p488 = pneg %p187
        $region78: #{tpu_custom_call.1} parent=67 // pred_check_branch
          %490 = sbr.rel (%p488) target = $region80
        $region79: #{tpu_custom_call.1} parent=67 // pred_region
          %491 = dma.done [#allocation7], 512
        $region80: #{tpu_custom_call.1} parent=67 // pred_fallthru
          _
        // Predicated region
        $region81: #{tpu_custom_call.1} parent=67 // pred_check
          %p492 = pneg %p229
        $region82: #{tpu_custom_call.1} parent=67 // pred_check_branch
          %494 = sbr.rel (%p492) target = $region84
        $region83: #{tpu_custom_call.1} parent=67 // pred_region
          %495 = dma.done [#allocation10], 512
        $region84: #{tpu_custom_call.1} parent=67 // pred_fallthru
          _
        // Predicated region
        $region85: #{tpu_custom_call.1} parent=67 // pred_check
          %p496 = pneg %p250
        $region86: #{tpu_custom_call.1} parent=67 // pred_check_branch
          %498 = sbr.rel (%p496) target = $region88
        $region87: #{tpu_custom_call.1} parent=67 // pred_region
          %499 = dma.done [#allocation10], 16
        $region88: #{tpu_custom_call.1} parent=67 // pred_fallthru
          _
        %s500 = sand.u32 %s43, 1
        %s501 = scalar_lea.sflag [#allocation4], %s500
        %s502 = sand.u32 %s43, 1
        %s503 = smul.addr %s502, 16
        %s504 = scalar_lea.vmem [#allocation3], %s503
        %p505 = pneg %p56
        %p506 = pneg %p53
        %s507 = sand.u32 %s35, 1
        %s508 = scalar_lea.sflag [#allocation7], %s507
        %s509 = sand.u32 %s69, 1
        %s510 = smul.addr %s509, 16
        %s511 = scalar_lea.vmem [#allocation6], %s510
        %p512 = pneg %p82
        %p513 = pneg %p79
        %p514 = pneg %p103
        %p515 = pneg %p100
        %p516 = pneg %p124
        %p517 = pneg %p121
        %p518 = pneg %p145
        %p519 = pneg %p142
        %p520 = pneg %p166
        %p521 = pneg %p163
        %p522 = pneg %p187
        %p523 = pneg %p184
        %p524 = pneg %p208
        %p525 = pneg %p205
        %p526 = pneg %p229
        %p527 = pneg %p226
        %p528 = pneg %p250
        %p529 = pneg %p247
        %p530 = pneg %p271
        %p531 = pneg %p268
        %p532 = pneg %p292
        %p533 = pneg %p289
        %p534 = pneg %p318
        %p535 = pneg %p315
        %s536 = sand.u32 %s305, 1
        %s537 = scalar_lea.sflag [#allocation5], %s536
        %s538 = sand.u32 %s305, 1
        %s539 = smul.addr %s538, 16
        %s540 = scalar_lea.vmem [#allocation12], %s539
        %p541 = pneg %p344
        %p542 = pneg %p341
        %p543 = scmp.lt.s32.totalorder %s35, 1
        %s544 = scalar_select %p543, %s35, 1
        %s545 = smul.addr %s544, 4
        %s546 = smul.addr %s545, 8
        %s547 = scalar_lea.vmem %s13, %s546
        %p548 = scmp.lt.s32.totalorder %s35, 1
        %s549 = scalar_select %p548, %s35, 1
        %s550 = smul.addr %s549, 4
        %s551 = smul.addr %s550, 8
        %s552 = scalar_lea.vmem %s13, %s551
        %v553 = vld [vmem:[%s474] sm:$0xff]
        %v554 = vld [vmem:[%s474 + $0x8] sm:$0xff]
        %v555 = vld [vmem:[%s2] sm:$0x1]
        %v556 = vld [vmem:[%s3] sm:$0x1]
        %vm557 = vcmask 261120
        %v558 = vsel %vm557, %v553, 0.0
        %559 = vadd.xlane.f32.xlu0 %v558
        %v560 = vpop.xlane.xlu0 %559
        %v561 = vsel %vm557, %v554, 0.0
        %562 = vadd.xlane.f32.xlu0 %v561
        %v563 = vpop.xlane.xlu0 %562
        %v564 = vrcp.pop 32.0
        %v565 = vmul.f32 %v560, %v564
        %v566 = vmul.f32 %v563, %v564
        %v567 = vsub.f32 %v553, %v565
        %v568 = vsub.f32 %v554, %v566
        %v569 = vmul.f32 %v567, %v567
        %v570 = vmul.f32 %v568, %v568
        %v571 = vsel %vm557, %v569, 0.0
        %572 = vadd.xlane.f32.xlu0 %v571
        %v573 = vpop.xlane.xlu0 %572
        %v574 = vsel %vm557, %v570, 0.0
        %575 = vadd.xlane.f32.xlu0 %v574
        %v576 = vpop.xlane.xlu0 %575
        %v577 = vmul.f32 %v573, %v564
        %v578 = vmul.f32 %v576, %v564
        %v579 = vadd.f32 %v577, 1e-05
        %v580 = vadd.f32 %v578, 1e-05
        %v581 = vrsqrt.pop %v579
        %v582 = vrsqrt.pop %v580
        %v583 = vmul.f32 %v567, %v581
        %v584 = vmul.f32 %v568, %v582
        %v586 = vlaneseq
        %v587 = vshrl.u32 %v586, 7
        %v588 = vsub.s32 0, %v587
        %v589 = vrot.slane %v555, %v588
        %v591 = vmul.f32 %v583, %v589
        %v592 = vmul.f32 %v584, %v589
        %v594 = vlaneseq
        %v595 = vshrl.u32 %v594, 7
        %v596 = vsub.s32 0, %v595
        %v597 = vrot.slane %v556, %v596
        %v599 = vadd.f32 %v591, %v597
        %v600 = vadd.f32 %v592, %v597
        %v601 = vld [vmem:[%s483] sm:$0xff]
        %v602 = vld [vmem:[%s483 + $0x8] sm:$0xff]
        %v603 = vld [vmem:[%s4] sm:$0x1]
        %v604 = vld [vmem:[%s5] sm:$0x1]
        %v605 = vsel %vm557, %v601, 0.0
        %606 = vadd.xlane.f32.xlu0 %v605
        %v607 = vpop.xlane.xlu0 %606
        %v608 = vsel %vm557, %v602, 0.0
        %609 = vadd.xlane.f32.xlu0 %v608
        %v610 = vpop.xlane.xlu0 %609
        %v611 = vmul.f32 %v607, %v564
        %v612 = vmul.f32 %v610, %v564
        %v613 = vsub.f32 %v601, %v611
        %v614 = vsub.f32 %v602, %v612
        %v615 = vmul.f32 %v613, %v613
        %v616 = vmul.f32 %v614, %v614
        %v617 = vsel %vm557, %v615, 0.0
        %618 = vadd.xlane.f32.xlu0 %v617
        %v619 = vpop.xlane.xlu0 %618
        %v620 = vsel %vm557, %v616, 0.0
        %621 = vadd.xlane.f32.xlu0 %v620
        %v622 = vpop.xlane.xlu0 %621
        %v623 = vmul.f32 %v619, %v564
        %v624 = vmul.f32 %v622, %v564
        %v625 = vadd.f32 %v623, 1e-05
        %v626 = vadd.f32 %v624, 1e-05
        %v627 = vrsqrt.pop %v625
        %v628 = vrsqrt.pop %v626
        %v629 = vmul.f32 %v613, %v627
        %v630 = vmul.f32 %v614, %v628
        %v632 = vlaneseq
        %v633 = vshrl.u32 %v632, 7
        %v634 = vsub.s32 0, %v633
        %v635 = vrot.slane %v603, %v634
        %v637 = vmul.f32 %v629, %v635
        %v638 = vmul.f32 %v630, %v635
        %v640 = vlaneseq
        %v641 = vshrl.u32 %v640, 7
        %v642 = vsub.s32 0, %v641
        %v643 = vrot.slane %v604, %v642
        %v645 = vadd.f32 %v637, %v643
        %v646 = vadd.f32 %v638, %v643
        %v647 = vld [vmem:[#allocation8] sm:$0xff]
        %v648 = vld [vmem:[#allocation8 + $0x8] sm:$0xff]
        %v649 = vld [vmem:[#allocation8 + $0x10] sm:$0xff]
        %v650 = vld [vmem:[#allocation8 + $0x18] sm:$0xff]
        %v651 = vld [vmem:[%s7] sm:$0x1]
        %v653 = vlaneseq
        %v654 = vshrl.u32 %v653, 7
        %v655 = vsub.s32 0, %v654
        %v656 = vrot.slane %v651, %v655
        %v659 = vsel %vm557, %v645, 0
        %v662 = vsel %vm557, %v646, 0
        %664 = vmatprep.subr.mxu0 0.0
        %665 = vmatpush1.msra.mxu0 %v647
        %666 = vmatprep.subr.mxu0 0.0
        %667 = vmatpush1.msra.mxu0 %v648
        %668 = vmatprep.subr.mxu0 0.0
        %669 = vmatpush1.msra.mxu0 %v649
        %670 = vmatprep.subr.mxu0 0.0
        %671 = vmatpush1.msra.mxu0 %v650
        %672 = vmatprep.subr.mxu0 0.0
        %673 = vmatpush1.msra.mxu0 0.0
        %674 = vmatprep.subr.mxu0 0.0
        %675 = vmatpush1.msra.mxu0 0.0
        %676 = vmatprep.subr.mxu0 0.0
        %677 = vmatpush1.msra.mxu0 0.0
        %678 = vmatprep.subr.mxu0 0.0
        %679 = vmatpush1.msra.mxu0 0.0
        %680 = vmatprep.subr.mxu0 0.0
        %681 = vmatpush1.msra.mxu0 0.0
        %682 = vmatprep.subr.mxu0 0.0
        %683 = vmatpush1.msra.mxu0 0.0
        %684 = vmatprep.subr.mxu0 0.0
        %685 = vmatpush1.msra.mxu0 0.0
        %686 = vmatprep.subr.mxu0 0.0
        %687 = vmatpush1.msra.mxu0 0.0
        %688 = vmatprep.subr.mxu0 0.0
        %689 = vmatpush1.msra.mxu0 0.0
        %690 = vmatprep.subr.mxu0 0.0
        %691 = vmatpush1.msra.mxu0 0.0
        %692 = vmatprep.subr.mxu0 0.0
        %693 = vmatpush1.msra.mxu0 0.0
        %694 = vmatprep.subr.mxu0 0.0
        %695 = vmatpush1.msra.mxu0 0.0
        %696 = vmatprep.subr.mxu0 0.0
        %697 = vmatpush1.msra.mxu0 0.0
        %698 = vmatprep.subr.mxu0 0.0
        %699 = vmatpush1.msra.mxu0 0.0
        %700 = vmatprep.subr.mxu0 0.0
        %701 = vmatpush1.msra.mxu0 0.0
        %702 = vmatprep.subr.mxu0 0.0
        %703 = vmatpush1.msra.mxu0 0.0
        %704 = vmatprep.subr.mxu0 0.0
        %705 = vmatpush1.msra.mxu0 0.0
        %706 = vmatprep.subr.mxu0 0.0
        %707 = vmatpush1.msra.mxu0 0.0
        %708 = vmatprep.subr.mxu0 0.0
        %709 = vmatpush1.msra.mxu0 0.0
        %710 = vmatprep.subr.mxu0 0.0
        %711 = vmatpush1.msra.mxu0 0.0
        %712 = vmatprep.subr.mxu0 0.0
        %713 = vmatpush1.msra.mxu0 0.0
        %714 = vmatprep.subr.mxu0 0.0
        %715 = vmatpush1.msra.mxu0 0.0
        %716 = vmatprep.subr.mxu0 0.0
        %717 = vmatpush1.msra.mxu0 0.0
        %718 = vmatprep.subr.mxu0 0.0
        %719 = vmatpush1.msra.mxu0 0.0
        %720 = vmatprep.subr.mxu0 0.0
        %721 = vmatpush1.msra.mxu0 0.0
        %722 = vmatprep.subr.mxu0 0.0
        %723 = vmatpush1.msra.mxu0 0.0
        %724 = vmatprep.subr.mxu0 0.0
        %725 = vmatpush1.msra.mxu0 0.0
        %726 = vmatprep.subr.mxu0 0.0
        %727 = vmatpush1.msra.mxu0 0.0
        %728 = vmatprep.mubr.f32.mxu0 0.0
        %729 = vmatmul.mubr.f32.gmra.mrb[0].mxu0 %v659
        %v730 = vpop.f32.mrb[0].mxu0
        %v731 = vadd.f32 %v656, %v730
        %v732 = vpop.f32.mrb[0].mxu0
        %733 = vmatprep.mubr.f32.mxu0 0.0
        %734 = vmatmul.mubr.f32.gmra.mrb[0].mxu0 %v662
        %v735 = vpop.f32.mrb[0].mxu0
        %v736 = vadd.f32 %v656, %v735
        %v737 = vpop.f32.mrb[0].mxu0
        %738 = vdwg.mxu0
        %v739 = vmul.f32 %v731, 0.35355338
        %v740 = vmul.f32 %v736, 0.35355338
        %v741 = vld [vmem:[#allocation9] sm:$0xff]
        %v742 = vld [vmem:[#allocation9 + $0x8] sm:$0xff]
        %v743 = vld [vmem:[#allocation9 + $0x10] sm:$0xff]
        %v744 = vld [vmem:[#allocation9 + $0x18] sm:$0xff]
        %v745 = vld [vmem:[#allocation11] sm:$0x1]
        %v747 = vlaneseq
        %v748 = vshrl.u32 %v747, 7
        %v749 = vsub.s32 0, %v748
        %v750 = vrot.slane %v745, %v749
        %v753 = vsel %vm557, %v599, 0
        %v756 = vsel %vm557, %v600, 0
        %758 = vmatprep.subr.mxu0 0.0
        %759 = vmatpush1.msra.mxu0 %v741
        %760 = vmatprep.subr.mxu0 0.0
        %761 = vmatpush1.msra.mxu0 %v742
        %762 = vmatprep.subr.mxu0 0.0
        %763 = vmatpush1.msra.mxu0 %v743
        %764 = vmatprep.subr.mxu0 0.0
        %765 = vmatpush1.msra.mxu0 %v744
        %766 = vmatprep.subr.mxu0 0.0
        %767 = vmatpush1.msra.mxu0 0.0
        %768 = vmatprep.subr.mxu0 0.0
        %769 = vmatpush1.msra.mxu0 0.0
        %770 = vmatprep.subr.mxu0 0.0
        %771 = vmatpush1.msra.mxu0 0.0
        %772 = vmatprep.subr.mxu0 0.0
        %773 = vmatpush1.msra.mxu0 0.0
        %774 = vmatprep.subr.mxu0 0.0
        %775 = vmatpush1.msra.mxu0 0.0
        %776 = vmatprep.subr.mxu0 0.0
        %777 = vmatpush1.msra.mxu0 0.0
        %778 = vmatprep.subr.mxu0 0.0
        %779 = vmatpush1.msra.mxu0 0.0
        %780 = vmatprep.subr.mxu0 0.0
        %781 = vmatpush1.msra.mxu0 0.0
        %782 = vmatprep.subr.mxu0 0.0
        %783 = vmatpush1.msra.mxu0 0.0
        %784 = vmatprep.subr.mxu0 0.0
        %785 = vmatpush1.msra.mxu0 0.0
        %786 = vmatprep.subr.mxu0 0.0
        %787 = vmatpush1.msra.mxu0 0.0
        %788 = vmatprep.subr.mxu0 0.0
        %789 = vmatpush1.msra.mxu0 0.0
        %790 = vmatprep.subr.mxu0 0.0
        %791 = vmatpush1.msra.mxu0 0.0
        %792 = vmatprep.subr.mxu0 0.0
        %793 = vmatpush1.msra.mxu0 0.0
        %794 = vmatprep.subr.mxu0 0.0
        %795 = vmatpush1.msra.mxu0 0.0
        %796 = vmatprep.subr.mxu0 0.0
        %797 = vmatpush1.msra.mxu0 0.0
        %798 = vmatprep.subr.mxu0 0.0
        %799 = vmatpush1.msra.mxu0 0.0
        %800 = vmatprep.subr.mxu0 0.0
        %801 = vmatpush1.msra.mxu0 0.0
        %802 = vmatprep.subr.mxu0 0.0
        %803 = vmatpush1.msra.mxu0 0.0
        %804 = vmatprep.subr.mxu0 0.0
        %805 = vmatpush1.msra.mxu0 0.0
        %806 = vmatprep.subr.mxu0 0.0
        %807 = vmatpush1.msra.mxu0 0.0
        %808 = vmatprep.subr.mxu0 0.0
        %809 = vmatpush1.msra.mxu0 0.0
        %810 = vmatprep.subr.mxu0 0.0
        %811 = vmatpush1.msra.mxu0 0.0
        %812 = vmatprep.subr.mxu0 0.0
        %813 = vmatpush1.msra.mxu0 0.0
        %814 = vmatprep.subr.mxu0 0.0
        %815 = vmatpush1.msra.mxu0 0.0
        %816 = vmatprep.subr.mxu0 0.0
        %817 = vmatpush1.msra.mxu0 0.0
        %818 = vmatprep.subr.mxu0 0.0
        %819 = vmatpush1.msra.mxu0 0.0
        %820 = vmatprep.subr.mxu0 0.0
        %821 = vmatpush1.msra.mxu0 0.0
        %822 = vmatprep.mubr.f32.mxu0 0.0
        %823 = vmatmul.mubr.f32.gmra.mrb[0].mxu0 %v753
        %v824 = vpop.f32.mrb[0].mxu0
        %v825 = vadd.f32 %v750, %v824
        %v826 = vpop.f32.mrb[0].mxu0
        %827 = vmatprep.mubr.f32.mxu0 0.0
        %828 = vmatmul.mubr.f32.gmra.mrb[0].mxu0 %v756
        %v829 = vpop.f32.mrb[0].mxu0
        %v830 = vadd.f32 %v750, %v829
        %v831 = vpop.f32.mrb[0].mxu0
        %832 = vdwg.mxu0
        %835 = vrot.lane.b32.xlu0 %v825, 96
        %v836 = vpop.permute.xlu0 %835
        %837 = vrot.lane.b32.xlu0 %v830, 96
        %v838 = vpop.permute.xlu0 %837
        %vm839 = vcmask 64512
        %v841 = vsel %vm839, %v739, 0
        %v844 = vsel %vm839, %v740, 0
        %v846 = vsel %vm839, %v836, 0
        %v848 = vsel %vm839, %v838, 0
        %850 = vmatprep.subr.mxu0 0.0
        %851 = vmatpush1.xpose.msra.mxu0 %v846
        %852 = vmatprep.subr.mxu0 0.0
        %853 = vmatpush1.xpose.msra.mxu0 %v848
        %854 = vmatprep.subr.mxu0 0.0
        %855 = vmatpush1.xpose.msra.mxu0 0.0
        %856 = vmatprep.subr.mxu0 0.0
        %857 = vmatpush1.xpose.msra.mxu0 0.0
        %858 = vmatprep.subr.mxu0 0.0
        %859 = vmatpush1.xpose.msra.mxu0 0.0
        %860 = vmatprep.subr.mxu0 0.0
        %861 = vmatpush1.xpose.msra.mxu0 0.0
        %862 = vmatprep.subr.mxu0 0.0
        %863 = vmatpush1.xpose.msra.mxu0 0.0
        %864 = vmatprep.subr.mxu0 0.0
        %865 = vmatpush1.xpose.msra.mxu0 0.0
        %866 = vmatprep.subr.mxu0 0.0
        %867 = vmatpush1.xpose.msra.mxu0 0.0
        %868 = vmatprep.subr.mxu0 0.0
        %869 = vmatpush1.xpose.msra.mxu0 0.0
        %870 = vmatprep.subr.mxu0 0.0
        %871 = vmatpush1.xpose.msra.mxu0 0.0
        %872 = vmatprep.subr.mxu0 0.0
        %873 = vmatpush1.xpose.msra.mxu0 0.0
        %874 = vmatprep.subr.mxu0 0.0
        %875 = vmatpush1.xpose.msra.mxu0 0.0
        %876 = vmatprep.subr.mxu0 0.0
        %877 = vmatpush1.xpose.msra.mxu0 0.0
        %878 = vmatprep.subr.mxu0 0.0
        %879 = vmatpush1.xpose.msra.mxu0 0.0
        %880 = vmatprep.subr.mxu0 0.0
        %881 = vmatpush1.xpose.msra.mxu0 0.0
        %882 = vmatprep.subr.mxu0 0.0
        %883 = vmatpush1.xpose.msra.mxu0 0.0
        %884 = vmatprep.subr.mxu0 0.0
        %885 = vmatpush1.xpose.msra.mxu0 0.0
        %886 = vmatprep.subr.mxu0 0.0
        %887 = vmatpush1.xpose.msra.mxu0 0.0
        %888 = vmatprep.subr.mxu0 0.0
        %889 = vmatpush1.xpose.msra.mxu0 0.0
        %890 = vmatprep.subr.mxu0 0.0
        %891 = vmatpush1.xpose.msra.mxu0 0.0
        %892 = vmatprep.subr.mxu0 0.0
        %893 = vmatpush1.xpose.msra.mxu0 0.0
        %894 = vmatprep.subr.mxu0 0.0
        %895 = vmatpush1.xpose.msra.mxu0 0.0
        %896 = vmatprep.subr.mxu0 0.0
        %897 = vmatpush1.xpose.msra.mxu0 0.0
        %898 = vmatprep.subr.mxu0 0.0
        %899 = vmatpush1.xpose.msra.mxu0 0.0
        %900 = vmatprep.subr.mxu0 0.0
        %901 = vmatpush1.xpose.msra.mxu0 0.0
        %902 = vmatprep.subr.mxu0 0.0
        %903 = vmatpush1.xpose.msra.mxu0 0.0
        %904 = vmatprep.subr.mxu0 0.0
        %905 = vmatpush1.xpose.msra.mxu0 0.0
        %906 = vmatprep.subr.mxu0 0.0
        %907 = vmatpush1.xpose.msra.mxu0 0.0
        %908 = vmatprep.subr.mxu0 0.0
        %909 = vmatpush1.xpose.msra.mxu0 0.0
        %910 = vmatprep.subr.mxu0 0.0
        %911 = vmatpush1.xpose.msra.mxu0 0.0
        %912 = vmatprep.subr.mxu0 0.0
        %913 = vmatpush1.xpose.msra.mxu0 0.0
        %914 = vmatprep.mubr.f32.mxu0 0.0
        %915 = vmatmul.mubr.f32.gmra.mrb[0].mxu0 %v841
        %v916 = vpop.f32.mrb[0].mxu0
        %v917 = vadd.f32 0.0, %v916
        %v918 = vpop.f32.mrb[0].mxu0
        %919 = vmatprep.mubr.f32.mxu0 0.0
        %920 = vmatmul.mubr.f32.gmra.mrb[0].mxu0 %v844
        %v921 = vpop.f32.mrb[0].mxu0
        %v922 = vadd.f32 0.0, %v921
        %v923 = vpop.f32.mrb[0].mxu0
        %924 = vdwg.mxu0
        %vm925 = vcmask 130048
        %v926 = vsel %vm925, %v917, -inf
        %v927 = vsel %vm925, %v922, -inf
        %v928 = vmax.f32 %v926, %v927
        %929 = vmax.xlane.f32.xlu0 %v928
        %v930 = vpop.xlane.xlu0 %929
        %v931 = vrot.slane %v930, 4
        %v932 = vmax.f32 %v930, %v931
        %v933 = vrot.slane %v932, 2
        %v934 = vmax.f32 %v932, %v933
        %v935 = vrot.slane %v934, 1
        %v936 = vmax.f32 %v934, %v935
        %s937 = vtos %v936
        %v938 = vstv %s937
        %v939 = vsub.f32 %v917, %v938
        %v940 = vsub.f32 %v922, %v938
        %v941 = vmul.f32 %v939, 1.442695
        %v942 = vpow.pop %v941
        %v943 = vmul.f32 %v940, 1.442695
        %v944 = vpow.pop %v943
        %v945 = vsel %vm925, %v942, 0.0
        %946 = vadd.xlane.f32.xlu0 %v945
        %v947 = vpop.xlane.xlu0 %946
        %v948 = vsel %vm925, %v944, 0.0
        %949 = vadd.xlane.f32.xlu0 %v948
        %v950 = vpop.xlane.xlu0 %949
        %v951 = vrcp.pop %v947
        %v952 = vrcp.pop %v950
        %v953 = vadd.f32 %v945, %v948
        %v954 = vrot.slane %v953, 4
        %v955 = vadd.f32 %v953, %v954
        %v956 = vrot.slane %v955, 2
        %v957 = vadd.f32 %v955, %v956
        %v958 = vrot.slane %v957, 1
        %v959 = vadd.f32 %v957, %v958
        %v960 = vrcp.pop %v959
        %v962 = vsel %vm925, %v942, 0
        %v965 = vsel %vm925, %v944, 0
        %967 = vmatprep.subr.mxu0 0.0
        %968 = vmatpush1.msra.mxu0 %v825
        %969 = vmatprep.subr.mxu0 0.0
        %970 = vmatpush1.msra.mxu0 %v830
        %971 = vmatprep.subr.mxu0 0.0
        %972 = vmatpush1.msra.mxu0 0.0
        %973 = vmatprep.subr.mxu0 0.0
        %974 = vmatpush1.msra.mxu0 0.0
        %975 = vmatprep.subr.mxu0 0.0
        %976 = vmatpush1.msra.mxu0 0.0
        %977 = vmatprep.subr.mxu0 0.0
        %978 = vmatpush1.msra.mxu0 0.0
        %979 = vmatprep.subr.mxu0 0.0
        %980 = vmatpush1.msra.mxu0 0.0
        %981 = vmatprep.subr.mxu0 0.0
        %982 = vmatpush1.msra.mxu0 0.0
        %983 = vmatprep.subr.mxu0 0.0
        %984 = vmatpush1.msra.mxu0 0.0
        %985 = vmatprep.subr.mxu0 0.0
        %986 = vmatpush1.msra.mxu0 0.0
        %987 = vmatprep.subr.mxu0 0.0
        %988 = vmatpush1.msra.mxu0 0.0
        %989 = vmatprep.subr.mxu0 0.0
        %990 = vmatpush1.msra.mxu0 0.0
        %991 = vmatprep.subr.mxu0 0.0
        %992 = vmatpush1.msra.mxu0 0.0
        %993 = vmatprep.subr.mxu0 0.0
        %994 = vmatpush1.msra.mxu0 0.0
        %995 = vmatprep.subr.mxu0 0.0
        %996 = vmatpush1.msra.mxu0 0.0
        %997 = vmatprep.subr.mxu0 0.0
        %998 = vmatpush1.msra.mxu0 0.0
        %999 = vmatprep.subr.mxu0 0.0
        %1000 = vmatpush1.msra.mxu0 0.0
        %1001 = vmatprep.subr.mxu0 0.0
        %1002 = vmatpush1.msra.mxu0 0.0
        %1003 = vmatprep.subr.mxu0 0.0
        %1004 = vmatpush1.msra.mxu0 0.0
        %1005 = vmatprep.subr.mxu0 0.0
        %1006 = vmatpush1.msra.mxu0 0.0
        %1007 = vmatprep.subr.mxu0 0.0
        %1008 = vmatpush1.msra.mxu0 0.0
        %1009 = vmatprep.subr.mxu0 0.0
        %1010 = vmatpush1.msra.mxu0 0.0
        %1011 = vmatprep.subr.mxu0 0.0
        %1012 = vmatpush1.msra.mxu0 0.0
        %1013 = vmatprep.subr.mxu0 0.0
        %1014 = vmatpush1.msra.mxu0 0.0
        %1015 = vmatprep.subr.mxu0 0.0
        %1016 = vmatpush1.msra.mxu0 0.0
        %1017 = vmatprep.subr.mxu0 0.0
        %1018 = vmatpush1.msra.mxu0 0.0
        %1019 = vmatprep.subr.mxu0 0.0
        %1020 = vmatpush1.msra.mxu0 0.0
        %1021 = vmatprep.subr.mxu0 0.0
        %1022 = vmatpush1.msra.mxu0 0.0
        %1023 = vmatprep.subr.mxu0 0.0
        %1024 = vmatpush1.msra.mxu0 0.0
        %1025 = vmatprep.subr.mxu0 0.0
        %1026 = vmatpush1.msra.mxu0 0.0
        %1027 = vmatprep.subr.mxu0 0.0
        %1028 = vmatpush1.msra.mxu0 0.0
        %1029 = vmatprep.subr.mxu0 0.0
        %1030 = vmatpush1.msra.mxu0 0.0
        %1031 = vmatprep.mubr.f32.mxu0 0.0
        %1032 = vmatmul.mubr.f32.gmra.mrb[0].mxu0 %v962
        %v1033 = vpop.f32.mrb[0].mxu0
        %v1034 = vadd.f32 0.0, %v1033
        %v1035 = vpop.f32.mrb[0].mxu0
        %1036 = vmatprep.mubr.f32.mxu0 0.0
        %1037 = vmatmul.mubr.f32.gmra.mrb[0].mxu0 %v965
        %v1038 = vpop.f32.mrb[0].mxu0
        %v1039 = vadd.f32 0.0, %v1038
        %v1040 = vpop.f32.mrb[0].mxu0
        %1041 = vdwg.mxu0
        %v1042 = vmul.f32 %v951, %v1034
        %v1043 = vmul.f32 %v952, %v1039
        %1044 = vst.msk [vmem:[#allocation2] sm:$0xff] %vm839, %v1042
        %1045 = vst.msk [vmem:[#allocation2 + $0x8] sm:$0xff] %vm839, %v1043
        %1046 = vrot.lane.b32.xlu0 %v825, 64
        %v1047 = vpop.permute.xlu0 %1046
        %1048 = vrot.lane.b32.xlu0 %v830, 64
        %v1049 = vpop.permute.xlu0 %1048
        %1052 = vxpose.xlu0.b32.start [1/16] %v1047, 128
        %1053 = vxpose.xlu0.b32.cont [2/16] %v1049, 128
        %1054 = vxpose.xlu0.b32.cont [3/16] 0.0, 128
        %1055 = vxpose.xlu0.b32.cont [4/16] 0.0, 128
        %1056 = vxpose.xlu0.b32.cont [5/16] 0.0, 128
        %1057 = vxpose.xlu0.b32.cont [6/16] 0.0, 128
        %1058 = vxpose.xlu0.b32.cont [7/16] 0.0, 128
        %1059 = vxpose.xlu0.b32.cont [8/16] 0.0, 128
        %1060 = vxpose.xlu0.b32.cont [9/16] 0.0, 128
        %1061 = vxpose.xlu0.b32.cont [10/16] 0.0, 128
        %1062 = vxpose.xlu0.b32.cont [11/16] 0.0, 128
        %1063 = vxpose.xlu0.b32.cont [12/16] 0.0, 128
        %1064 = vxpose.xlu0.b32.cont [13/16] 0.0, 128
        %1065 = vxpose.xlu0.b32.cont [14/16] 0.0, 128
        %1066 = vxpose.xlu0.b32.cont [15/16] 0.0, 128
        %1067 = vxpose.xlu0.b32.end [16/16] 0.0, 128
        %v1068 = vpop.trf.xlu0
        %v1069 = vpop.trf.xlu0
        %v1070 = vpop.trf.xlu0
        %v1071 = vpop.trf.xlu0
        %v1072 = vpop.trf.xlu0
        %v1073 = vpop.trf.xlu0
        %v1074 = vpop.trf.xlu0
        %v1075 = vpop.trf.xlu0
        %v1076 = vpop.trf.xlu0
        %v1077 = vpop.trf.xlu0
        %v1078 = vpop.trf.xlu0
        %v1079 = vpop.trf.xlu0
        %v1080 = vpop.trf.xlu0
        %v1081 = vpop.trf.xlu0
        %v1082 = vpop.trf.xlu0
        %v1083 = vpop.trf.xlu0
        %v1085 = vsel %vm925, %v1068, 0
        %1087 = vmatprep.subr.mxu0 0.0
        %1088 = vmatpush1.msra.mxu0 %v942
        %1089 = vmatprep.subr.mxu0 0.0
        %1090 = vmatpush1.msra.mxu0 %v944
        %1091 = vmatprep.subr.mxu0 0.0
        %1092 = vmatpush1.msra.mxu0 0.0
        %1093 = vmatprep.subr.mxu0 0.0
        %1094 = vmatpush1.msra.mxu0 0.0
        %1095 = vmatprep.subr.mxu0 0.0
        %1096 = vmatpush1.msra.mxu0 0.0
        %1097 = vmatprep.subr.mxu0 0.0
        %1098 = vmatpush1.msra.mxu0 0.0
        %1099 = vmatprep.subr.mxu0 0.0
        %1100 = vmatpush1.msra.mxu0 0.0
        %1101 = vmatprep.subr.mxu0 0.0
        %1102 = vmatpush1.msra.mxu0 0.0
        %1103 = vmatprep.subr.mxu0 0.0
        %1104 = vmatpush1.msra.mxu0 0.0
        %1105 = vmatprep.subr.mxu0 0.0
        %1106 = vmatpush1.msra.mxu0 0.0
        %1107 = vmatprep.subr.mxu0 0.0
        %1108 = vmatpush1.msra.mxu0 0.0
        %1109 = vmatprep.subr.mxu0 0.0
        %1110 = vmatpush1.msra.mxu0 0.0
        %1111 = vmatprep.subr.mxu0 0.0
        %1112 = vmatpush1.msra.mxu0 0.0
        %1113 = vmatprep.subr.mxu0 0.0
        %1114 = vmatpush1.msra.mxu0 0.0
        %1115 = vmatprep.subr.mxu0 0.0
        %1116 = vmatpush1.msra.mxu0 0.0
        %1117 = vmatprep.subr.mxu0 0.0
        %1118 = vmatpush1.msra.mxu0 0.0
        %1119 = vmatprep.subr.mxu0 0.0
        %1120 = vmatpush1.msra.mxu0 0.0
        %1121 = vmatprep.subr.mxu0 0.0
        %1122 = vmatpush1.msra.mxu0 0.0
        %1123 = vmatprep.subr.mxu0 0.0
        %1124 = vmatpush1.msra.mxu0 0.0
        %1125 = vmatprep.subr.mxu0 0.0
        %1126 = vmatpush1.msra.mxu0 0.0
        %1127 = vmatprep.subr.mxu0 0.0
        %1128 = vmatpush1.msra.mxu0 0.0
        %1129 = vmatprep.subr.mxu0 0.0
        %1130 = vmatpush1.msra.mxu0 0.0
        %1131 = vmatprep.subr.mxu0 0.0
        %1132 = vmatpush1.msra.mxu0 0.0
        %1133 = vmatprep.subr.mxu0 0.0
        %1134 = vmatpush1.msra.mxu0 0.0
        %1135 = vmatprep.subr.mxu0 0.0
        %1136 = vmatpush1.msra.mxu0 0.0
        %1137 = vmatprep.subr.mxu0 0.0
        %1138 = vmatpush1.msra.mxu0 0.0
        %1139 = vmatprep.subr.mxu0 0.0
        %1140 = vmatpush1.msra.mxu0 0.0
        %1141 = vmatprep.subr.mxu0 0.0
        %1142 = vmatpush1.msra.mxu0 0.0
        %1143 = vmatprep.subr.mxu0 0.0
        %1144 = vmatpush1.msra.mxu0 0.0
        %1145 = vmatprep.subr.mxu0 0.0
        %1146 = vmatpush1.msra.mxu0 0.0
        %1147 = vmatprep.subr.mxu0 0.0
        %1148 = vmatpush1.msra.mxu0 0.0
        %1149 = vmatprep.subr.mxu0 0.0
        %1150 = vmatpush1.msra.mxu0 0.0
        %1151 = vmatprep.mubr.f32.mxu0 0.0
        %1152 = vmatmul.mubr.f32.gmra.mrb[0].mxu0 %v1085
        %v1153 = vpop.f32.mrb[0].mxu0
        %v1154 = vadd.f32 0.0, %v1153
        %v1155 = vpop.f32.mrb[0].mxu0
        %1156 = vdwg.mxu0
        %v1157 = vmul.f32 %v1154, %v960
        %1158 = vst.msk [vmem:[%s552] sm:$0xff] %vm925, %v1157
        %1159 = vrot.lane.b32.xlu0 %v739, 120
        %v1160 = vpop.permute.xlu0 %1159
        %1161 = vrot.lane.b32.xlu0 %v740, 120
        %v1162 = vpop.permute.xlu0 %1161
        %1163 = vrot.lane.b32.xlu0 %v825, 88
        %v1164 = vpop.permute.xlu0 %1163
        %1165 = vrot.lane.b32.xlu0 %v830, 88
        %v1166 = vpop.permute.xlu0 %1165
        %v1167 = vsel %vm839, %v1160, 0
        %v1169 = vsel %vm839, %v1162, 0
        %v1171 = vsel %vm839, %v1164, 0
        %v1173 = vsel %vm839, %v1166, 0
        %1175 = vmatprep.subr.mxu0 0.0
        %1176 = vmatpush1.xpose.msra.mxu0 %v1171
        %1177 = vmatprep.subr.mxu0 0.0
        %1178 = vmatpush1.xpose.msra.mxu0 %v1173
        %1179 = vmatprep.subr.mxu0 0.0
        %1180 = vmatpush1.xpose.msra.mxu0 0.0
        %1181 = vmatprep.subr.mxu0 0.0
        %1182 = vmatpush1.xpose.msra.mxu0 0.0
        %1183 = vmatprep.subr.mxu0 0.0
        %1184 = vmatpush1.xpose.msra.mxu0 0.0
        %1185 = vmatprep.subr.mxu0 0.0
        %1186 = vmatpush1.xpose.msra.mxu0 0.0
        %1187 = vmatprep.subr.mxu0 0.0
        %1188 = vmatpush1.xpose.msra.mxu0 0.0
        %1189 = vmatprep.subr.mxu0 0.0
        %1190 = vmatpush1.xpose.msra.mxu0 0.0
        %1191 = vmatprep.subr.mxu0 0.0
        %1192 = vmatpush1.xpose.msra.mxu0 0.0
        %1193 = vmatprep.subr.mxu0 0.0
        %1194 = vmatpush1.xpose.msra.mxu0 0.0
        %1195 = vmatprep.subr.mxu0 0.0
        %1196 = vmatpush1.xpose.msra.mxu0 0.0
        %1197 = vmatprep.subr.mxu0 0.0
        %1198 = vmatpush1.xpose.msra.mxu0 0.0
        %1199 = vmatprep.subr.mxu0 0.0
        %1200 = vmatpush1.xpose.msra.mxu0 0.0
        %1201 = vmatprep.subr.mxu0 0.0
        %1202 = vmatpush1.xpose.msra.mxu0 0.0
        %1203 = vmatprep.subr.mxu0 0.0
        %1204 = vmatpush1.xpose.msra.mxu0 0.0
        %1205 = vmatprep.subr.mxu0 0.0
        %1206 = vmatpush1.xpose.msra.mxu0 0.0
        %1207 = vmatprep.subr.mxu0 0.0
        %1208 = vmatpush1.xpose.msra.mxu0 0.0
        %1209 = vmatprep.subr.mxu0 0.0
        %1210 = vmatpush1.xpose.msra.mxu0 0.0
        %1211 = vmatprep.subr.mxu0 0.0
        %1212 = vmatpush1.xpose.msra.mxu0 0.0
        %1213 = vmatprep.subr.mxu0 0.0
        %1214 = vmatpush1.xpose.msra.mxu0 0.0
        %1215 = vmatprep.subr.mxu0 0.0
        %1216 = vmatpush1.xpose.msra.mxu0 0.0
        %1217 = vmatprep.subr.mxu0 0.0
        %1218 = vmatpush1.xpose.msra.mxu0 0.0
        %1219 = vmatprep.subr.mxu0 0.0
        %1220 = vmatpush1.xpose.msra.mxu0 0.0
        %1221 = vmatprep.subr.mxu0 0.0
        %1222 = vmatpush1.xpose.msra.mxu0 0.0
        %1223 = vmatprep.subr.mxu0 0.0
        %1224 = vmatpush1.xpose.msra.mxu0 0.0
        %1225 = vmatprep.subr.mxu0 0.0
        %1226 = vmatpush1.xpose.msra.mxu0 0.0
        %1227 = vmatprep.subr.mxu0 0.0
        %1228 = vmatpush1.xpose.msra.mxu0 0.0
        %1229 = vmatprep.subr.mxu0 0.0
        %1230 = vmatpush1.xpose.msra.mxu0 0.0
        %1231 = vmatprep.subr.mxu0 0.0
        %1232 = vmatpush1.xpose.msra.mxu0 0.0
        %1233 = vmatprep.subr.mxu0 0.0
        %1234 = vmatpush1.xpose.msra.mxu0 0.0
        %1235 = vmatprep.subr.mxu0 0.0
        %1236 = vmatpush1.xpose.msra.mxu0 0.0
        %1237 = vmatprep.subr.mxu0 0.0
        %1238 = vmatpush1.xpose.msra.mxu0 0.0
        %1239 = vmatprep.mubr.f32.mxu0 0.0
        %1240 = vmatmul.mubr.f32.gmra.mrb[0].mxu0 %v1167
        %v1241 = vpop.f32.mrb[0].mxu0
        %v1242 = vadd.f32 0.0, %v1241
        %v1243 = vpop.f32.mrb[0].mxu0
        %1244 = vmatprep.mubr.f32.mxu0 0.0
        %1245 = vmatmul.mubr.f32.gmra.mrb[0].mxu0 %v1169
        %v1246 = vpop.f32.mrb[0].mxu0
        %v1247 = vadd.f32 0.0, %v1246
        %v1248 = vpop.f32.mrb[0].mxu0
        %1249 = vdwg.mxu0
        %v1250 = vsel %vm925, %v1242, -inf
        %v1251 = vsel %vm925, %v1247, -inf
        %v1252 = vmax.f32 %v1250, %v1251
        %1253 = vmax.xlane.f32.xlu0 %v1252
        %v1254 = vpop.xlane.xlu0 %1253
        %v1255 = vrot.slane %v1254, 4
        %v1256 = vmax.f32 %v1254, %v1255
        %v1257 = vrot.slane %v1256, 2
        %v1258 = vmax.f32 %v1256, %v1257
        %v1259 = vrot.slane %v1258, 1
        %v1260 = vmax.f32 %v1258, %v1259
        %s1261 = vtos %v1260
        %v1262 = vstv %s1261
        %v1263 = vsub.f32 %v1242, %v1262
        %v1264 = vsub.f32 %v1247, %v1262
        %v1265 = vmul.f32 %v1263, 1.442695
        %v1266 = vpow.pop %v1265
        %v1267 = vmul.f32 %v1264, 1.442695
        %v1268 = vpow.pop %v1267
        %v1269 = vsel %vm925, %v1266, 0.0
        %1270 = vadd.xlane.f32.xlu0 %v1269
        %v1271 = vpop.xlane.xlu0 %1270
        %v1272 = vsel %vm925, %v1268, 0.0
        %1273 = vadd.xlane.f32.xlu0 %v1272
        %v1274 = vpop.xlane.xlu0 %1273
        %v1275 = vrcp.pop %v1271
        %v1276 = vrcp.pop %v1274
        %v1277 = vadd.f32 %v1269, %v1272
        %v1278 = vrot.slane %v1277, 4
        %v1279 = vadd.f32 %v1277, %v1278
        %v1280 = vrot.slane %v1279, 2
        %v1281 = vadd.f32 %v1279, %v1280
        %v1282 = vrot.slane %v1281, 1
        %v1283 = vadd.f32 %v1281, %v1282
        %v1284 = vrcp.pop %v1283
        %1285 = vrot.lane.b32.xlu0 %v825, 120
        %v1286 = vpop.permute.xlu0 %1285
        %1287 = vrot.lane.b32.xlu0 %v830, 120
        %v1288 = vpop.permute.xlu0 %1287
        %v1292 = vsel %vm925, %v1266, 0
        %v1295 = vsel %vm925, %v1268, 0
        %1297 = vmatprep.subr.mxu0 0.0
        %1298 = vmatpush1.msra.mxu0 %v1286
        %1299 = vmatprep.subr.mxu0 0.0
        %1300 = vmatpush1.msra.mxu0 %v1288
        %1301 = vmatprep.subr.mxu0 0.0
        %1302 = vmatpush1.msra.mxu0 0.0
        %1303 = vmatprep.subr.mxu0 0.0
        %1304 = vmatpush1.msra.mxu0 0.0
        %1305 = vmatprep.subr.mxu0 0.0
        %1306 = vmatpush1.msra.mxu0 0.0
        %1307 = vmatprep.subr.mxu0 0.0
        %1308 = vmatpush1.msra.mxu0 0.0
        %1309 = vmatprep.subr.mxu0 0.0
        %1310 = vmatpush1.msra.mxu0 0.0
        %1311 = vmatprep.subr.mxu0 0.0
        %1312 = vmatpush1.msra.mxu0 0.0
        %1313 = vmatprep.subr.mxu0 0.0
        %1314 = vmatpush1.msra.mxu0 0.0
        %1315 = vmatprep.subr.mxu0 0.0
        %1316 = vmatpush1.msra.mxu0 0.0
        %1317 = vmatprep.subr.mxu0 0.0
        %1318 = vmatpush1.msra.mxu0 0.0
        %1319 = vmatprep.subr.mxu0 0.0
        %1320 = vmatpush1.msra.mxu0 0.0
        %1321 = vmatprep.subr.mxu0 0.0
        %1322 = vmatpush1.msra.mxu0 0.0
        %1323 = vmatprep.subr.mxu0 0.0
        %1324 = vmatpush1.msra.mxu0 0.0
        %1325 = vmatprep.subr.mxu0 0.0
        %1326 = vmatpush1.msra.mxu0 0.0
        %1327 = vmatprep.subr.mxu0 0.0
        %1328 = vmatpush1.msra.mxu0 0.0
        %1329 = vmatprep.subr.mxu0 0.0
        %1330 = vmatpush1.msra.mxu0 0.0
        %1331 = vmatprep.subr.mxu0 0.0
        %1332 = vmatpush1.msra.mxu0 0.0
        %1333 = vmatprep.subr.mxu0 0.0
        %1334 = vmatpush1.msra.mxu0 0.0
        %1335 = vmatprep.subr.mxu0 0.0
        %1336 = vmatpush1.msra.mxu0 0.0
        %1337 = vmatprep.subr.mxu0 0.0
        %1338 = vmatpush1.msra.mxu0 0.0
        %1339 = vmatprep.subr.mxu0 0.0
        %1340 = vmatpush1.msra.mxu0 0.0
        %1341 = vmatprep.subr.mxu0 0.0
        %1342 = vmatpush1.msra.mxu0 0.0
        %1343 = vmatprep.subr.mxu0 0.0
        %1344 = vmatpush1.msra.mxu0 0.0
        %1345 = vmatprep.subr.mxu0 0.0
        %1346 = vmatpush1.msra.mxu0 0.0
        %1347 = vmatprep.subr.mxu0 0.0
        %1348 = vmatpush1.msra.mxu0 0.0
        %1349 = vmatprep.subr.mxu0 0.0
        %1350 = vmatpush1.msra.mxu0 0.0
        %1351 = vmatprep.subr.mxu0 0.0
        %1352 = vmatpush1.msra.mxu0 0.0
        %1353 = vmatprep.subr.mxu0 0.0
        %1354 = vmatpush1.msra.mxu0 0.0
        %1355 = vmatprep.subr.mxu0 0.0
        %1356 = vmatpush1.msra.mxu0 0.0
        %1357 = vmatprep.subr.mxu0 0.0
        %1358 = vmatpush1.msra.mxu0 0.0
        %1359 = vmatprep.subr.mxu0 0.0
        %1360 = vmatpush1.msra.mxu0 0.0
        %1361 = vmatprep.mubr.f32.mxu0 0.0
        %1362 = vmatmul.mubr.f32.gmra.mrb[0].mxu0 %v1292
        %v1363 = vpop.f32.mrb[0].mxu0
        %v1364 = vadd.f32 0.0, %v1363
        %v1365 = vpop.f32.mrb[0].mxu0
        %1366 = vmatprep.mubr.f32.mxu0 0.0
        %1367 = vmatmul.mubr.f32.gmra.mrb[0].mxu0 %v1295
        %v1368 = vpop.f32.mrb[0].mxu0
        %v1369 = vadd.f32 0.0, %v1368
        %v1370 = vpop.f32.mrb[0].mxu0
        %1371 = vdwg.mxu0
        %v1372 = vmul.f32 %v1275, %v1364
        %v1373 = vmul.f32 %v1276, %v1369
        %1376 = vrot.lane.b32.xlu0 %v1372, 8
        %v1377 = vpop.permute.xlu0 %1376
        %1378 = vrot.lane.b32.xlu0 %v1373, 8
        %v1379 = vpop.permute.xlu0 %1378
        %vm1382 = vcmask 130112
        %1383 = vst.msk [vmem:[#allocation2] sm:$0xff] %vm1382, %v1377
        %1384 = vst.msk [vmem:[#allocation2 + $0x8] sm:$0xff] %vm1382, %v1379
        %1385 = vrot.lane.b32.xlu0 %v825, 56
        %v1386 = vpop.permute.xlu0 %1385
        %1387 = vrot.lane.b32.xlu0 %v830, 56
        %v1388 = vpop.permute.xlu0 %1387
        %1391 = vxpose.xlu0.b32.start [1/16] %v1386, 128
        %1392 = vxpose.xlu0.b32.cont [2/16] %v1388, 128
        %1393 = vxpose.xlu0.b32.cont [3/16] 0.0, 128
        %1394 = vxpose.xlu0.b32.cont [4/16] 0.0, 128
        %1395 = vxpose.xlu0.b32.cont [5/16] 0.0, 128
        %1396 = vxpose.xlu0.b32.cont [6/16] 0.0, 128
        %1397 = vxpose.xlu0.b32.cont [7/16] 0.0, 128
        %1398 = vxpose.xlu0.b32.cont [8/16] 0.0, 128
        %1399 = vxpose.xlu0.b32.cont [9/16] 0.0, 128
        %1400 = vxpose.xlu0.b32.cont [10/16] 0.0, 128
        %1401 = vxpose.xlu0.b32.cont [11/16] 0.0, 128
        %1402 = vxpose.xlu0.b32.cont [12/16] 0.0, 128
        %1403 = vxpose.xlu0.b32.cont [13/16] 0.0, 128
        %1404 = vxpose.xlu0.b32.cont [14/16] 0.0, 128
        %1405 = vxpose.xlu0.b32.cont [15/16] 0.0, 128
        %1406 = vxpose.xlu0.b32.end [16/16] 0.0, 128
        %v1407 = vpop.trf.xlu0
        %v1408 = vpop.trf.xlu0
        %v1409 = vpop.trf.xlu0
        %v1410 = vpop.trf.xlu0
        %v1411 = vpop.trf.xlu0
        %v1412 = vpop.trf.xlu0
        %v1413 = vpop.trf.xlu0
        %v1414 = vpop.trf.xlu0
        %v1415 = vpop.trf.xlu0
        %v1416 = vpop.trf.xlu0
        %v1417 = vpop.trf.xlu0
        %v1418 = vpop.trf.xlu0
        %v1419 = vpop.trf.xlu0
        %v1420 = vpop.trf.xlu0
        %v1421 = vpop.trf.xlu0
        %v1422 = vpop.trf.xlu0
        %v1424 = vsel %vm925, %v1407, 0
        %1426 = vmatprep.subr.mxu0 0.0
        %1427 = vmatpush1.msra.mxu0 %v1266
        %1428 = vmatprep.subr.mxu0 0.0
        %1429 = vmatpush1.msra.mxu0 %v1268
        %1430 = vmatprep.subr.mxu0 0.0
        %1431 = vmatpush1.msra.mxu0 0.0
        %1432 = vmatprep.subr.mxu0 0.0
        %1433 = vmatpush1.msra.mxu0 0.0
        %1434 = vmatprep.subr.mxu0 0.0
        %1435 = vmatpush1.msra.mxu0 0.0
        %1436 = vmatprep.subr.mxu0 0.0
        %1437 = vmatpush1.msra.mxu0 0.0
        %1438 = vmatprep.subr.mxu0 0.0
        %1439 = vmatpush1.msra.mxu0 0.0
        %1440 = vmatprep.subr.mxu0 0.0
        %1441 = vmatpush1.msra.mxu0 0.0
        %1442 = vmatprep.subr.mxu0 0.0
        %1443 = vmatpush1.msra.mxu0 0.0
        %1444 = vmatprep.subr.mxu0 0.0
        %1445 = vmatpush1.msra.mxu0 0.0
        %1446 = vmatprep.subr.mxu0 0.0
        %1447 = vmatpush1.msra.mxu0 0.0
        %1448 = vmatprep.subr.mxu0 0.0
        %1449 = vmatpush1.msra.mxu0 0.0
        %1450 = vmatprep.subr.mxu0 0.0
        %1451 = vmatpush1.msra.mxu0 0.0
        %1452 = vmatprep.subr.mxu0 0.0
        %1453 = vmatpush1.msra.mxu0 0.0
        %1454 = vmatprep.subr.mxu0 0.0
        %1455 = vmatpush1.msra.mxu0 0.0
        %1456 = vmatprep.subr.mxu0 0.0
        %1457 = vmatpush1.msra.mxu0 0.0
        %1458 = vmatprep.subr.mxu0 0.0
        %1459 = vmatpush1.msra.mxu0 0.0
        %1460 = vmatprep.subr.mxu0 0.0
        %1461 = vmatpush1.msra.mxu0 0.0
        %1462 = vmatprep.subr.mxu0 0.0
        %1463 = vmatpush1.msra.mxu0 0.0
        %1464 = vmatprep.subr.mxu0 0.0
        %1465 = vmatpush1.msra.mxu0 0.0
        %1466 = vmatprep.subr.mxu0 0.0
        %1467 = vmatpush1.msra.mxu0 0.0
        %1468 = vmatprep.subr.mxu0 0.0
        %1469 = vmatpush1.msra.mxu0 0.0
        %1470 = vmatprep.subr.mxu0 0.0
        %1471 = vmatpush1.msra.mxu0 0.0
        %1472 = vmatprep.subr.mxu0 0.0
        %1473 = vmatpush1.msra.mxu0 0.0
        %1474 = vmatprep.subr.mxu0 0.0
        %1475 = vmatpush1.msra.mxu0 0.0
        %1476 = vmatprep.subr.mxu0 0.0
        %1477 = vmatpush1.msra.mxu0 0.0
        %1478 = vmatprep.subr.mxu0 0.0
        %1479 = vmatpush1.msra.mxu0 0.0
        %1480 = vmatprep.subr.mxu0 0.0
        %1481 = vmatpush1.msra.mxu0 0.0
        %1482 = vmatprep.subr.mxu0 0.0
        %1483 = vmatpush1.msra.mxu0 0.0
        %1484 = vmatprep.subr.mxu0 0.0
        %1485 = vmatpush1.msra.mxu0 0.0
        %1486 = vmatprep.subr.mxu0 0.0
        %1487 = vmatpush1.msra.mxu0 0.0
        %1488 = vmatprep.subr.mxu0 0.0
        %1489 = vmatpush1.msra.mxu0 0.0
        %1490 = vmatprep.mubr.f32.mxu0 0.0
        %1491 = vmatmul.mubr.f32.gmra.mrb[0].mxu0 %v1424
        %v1492 = vpop.f32.mrb[0].mxu0
        %v1493 = vadd.f32 0.0, %v1492
        %v1494 = vpop.f32.mrb[0].mxu0
        %1495 = vdwg.mxu0
        %v1496 = vmul.f32 %v1493, %v1284
        %1497 = vst.msk [vmem:[%s552 + $0x8] sm:$0xff] %vm925, %v1496
        %1498 = vrot.lane.b32.xlu0 %v739, 112
        %v1499 = vpop.permute.xlu0 %1498
        %1500 = vrot.lane.b32.xlu0 %v740, 112
        %v1501 = vpop.permute.xlu0 %1500
        %1502 = vrot.lane.b32.xlu0 %v825, 80
        %v1503 = vpop.permute.xlu0 %1502
        %1504 = vrot.lane.b32.xlu0 %v830, 80
        %v1505 = vpop.permute.xlu0 %1504
        %v1506 = vsel %vm839, %v1499, 0
        %v1508 = vsel %vm839, %v1501, 0
        %v1510 = vsel %vm839, %v1503, 0
        %v1512 = vsel %vm839, %v1505, 0
        %1514 = vmatprep.subr.mxu0 0.0
        %1515 = vmatpush1.xpose.msra.mxu0 %v1510
        %1516 = vmatprep.subr.mxu0 0.0
        %1517 = vmatpush1.xpose.msra.mxu0 %v1512
        %1518 = vmatprep.subr.mxu0 0.0
        %1519 = vmatpush1.xpose.msra.mxu0 0.0
        %1520 = vmatprep.subr.mxu0 0.0
        %1521 = vmatpush1.xpose.msra.mxu0 0.0
        %1522 = vmatprep.subr.mxu0 0.0
        %1523 = vmatpush1.xpose.msra.mxu0 0.0
        %1524 = vmatprep.subr.mxu0 0.0
        %1525 = vmatpush1.xpose.msra.mxu0 0.0
        %1526 = vmatprep.subr.mxu0 0.0
        %1527 = vmatpush1.xpose.msra.mxu0 0.0
        %1528 = vmatprep.subr.mxu0 0.0
        %1529 = vmatpush1.xpose.msra.mxu0 0.0
        %1530 = vmatprep.subr.mxu0 0.0
        %1531 = vmatpush1.xpose.msra.mxu0 0.0
        %1532 = vmatprep.subr.mxu0 0.0
        %1533 = vmatpush1.xpose.msra.mxu0 0.0
        %1534 = vmatprep.subr.mxu0 0.0
        %1535 = vmatpush1.xpose.msra.mxu0 0.0
        %1536 = vmatprep.subr.mxu0 0.0
        %1537 = vmatpush1.xpose.msra.mxu0 0.0
        %1538 = vmatprep.subr.mxu0 0.0
        %1539 = vmatpush1.xpose.msra.mxu0 0.0
        %1540 = vmatprep.subr.mxu0 0.0
        %1541 = vmatpush1.xpose.msra.mxu0 0.0
        %1542 = vmatprep.subr.mxu0 0.0
        %1543 = vmatpush1.xpose.msra.mxu0 0.0
        %1544 = vmatprep.subr.mxu0 0.0
        %1545 = vmatpush1.xpose.msra.mxu0 0.0
        %1546 = vmatprep.subr.mxu0 0.0
        %1547 = vmatpush1.xpose.msra.mxu0 0.0
        %1548 = vmatprep.subr.mxu0 0.0
        %1549 = vmatpush1.xpose.msra.mxu0 0.0
        %1550 = vmatprep.subr.mxu0 0.0
        %1551 = vmatpush1.xpose.msra.mxu0 0.0
        %1552 = vmatprep.subr.mxu0 0.0
        %1553 = vmatpush1.xpose.msra.mxu0 0.0
        %1554 = vmatprep.subr.mxu0 0.0
        %1555 = vmatpush1.xpose.msra.mxu0 0.0
        %1556 = vmatprep.subr.mxu0 0.0
        %1557 = vmatpush1.xpose.msra.mxu0 0.0
        %1558 = vmatprep.subr.mxu0 0.0
        %1559 = vmatpush1.xpose.msra.mxu0 0.0
        %1560 = vmatprep.subr.mxu0 0.0
        %1561 = vmatpush1.xpose.msra.mxu0 0.0
        %1562 = vmatprep.subr.mxu0 0.0
        %1563 = vmatpush1.xpose.msra.mxu0 0.0
        %1564 = vmatprep.subr.mxu0 0.0
        %1565 = vmatpush1.xpose.msra.mxu0 0.0
        %1566 = vmatprep.subr.mxu0 0.0
        %1567 = vmatpush1.xpose.msra.mxu0 0.0
        %1568 = vmatprep.subr.mxu0 0.0
        %1569 = vmatpush1.xpose.msra.mxu0 0.0
        %1570 = vmatprep.subr.mxu0 0.0
        %1571 = vmatpush1.xpose.msra.mxu0 0.0
        %1572 = vmatprep.subr.mxu0 0.0
        %1573 = vmatpush1.xpose.msra.mxu0 0.0
        %1574 = vmatprep.subr.mxu0 0.0
        %1575 = vmatpush1.xpose.msra.mxu0 0.0
        %1576 = vmatprep.subr.mxu0 0.0
        %1577 = vmatpush1.xpose.msra.mxu0 0.0
        %1578 = vmatprep.mubr.f32.mxu0 0.0
        %1579 = vmatmul.mubr.f32.gmra.mrb[0].mxu0 %v1506
        %v1580 = vpop.f32.mrb[0].mxu0
        %v1581 = vadd.f32 0.0, %v1580
        %v1582 = vpop.f32.mrb[0].mxu0
        %1583 = vmatprep.mubr.f32.mxu0 0.0
        %1584 = vmatmul.mubr.f32.gmra.mrb[0].mxu0 %v1508
        %v1585 = vpop.f32.mrb[0].mxu0
        %v1586 = vadd.f32 0.0, %v1585
        %v1587 = vpop.f32.mrb[0].mxu0
        %1588 = vdwg.mxu0
        %v1589 = vsel %vm925, %v1581, -inf
        %v1590 = vsel %vm925, %v1586, -inf
        %v1591 = vmax.f32 %v1589, %v1590
        %1592 = vmax.xlane.f32.xlu0 %v1591
        %v1593 = vpop.xlane.xlu0 %1592
        %v1594 = vrot.slane %v1593, 4
        %v1595 = vmax.f32 %v1593, %v1594
        %v1596 = vrot.slane %v1595, 2
        %v1597 = vmax.f32 %v1595, %v1596
        %v1598 = vrot.slane %v1597, 1
        %v1599 = vmax.f32 %v1597, %v1598
        %s1600 = vtos %v1599
        %v1601 = vstv %s1600
        %v1602 = vsub.f32 %v1581, %v1601
        %v1603 = vsub.f32 %v1586, %v1601
        %v1604 = vmul.f32 %v1602, 1.442695
        %v1605 = vpow.pop %v1604
        %v1606 = vmul.f32 %v1603, 1.442695
        %v1607 = vpow.pop %v1606
        %v1608 = vsel %vm925, %v1605, 0.0
        %1609 = vadd.xlane.f32.xlu0 %v1608
        %v1610 = vpop.xlane.xlu0 %1609
        %v1611 = vsel %vm925, %v1607, 0.0
        %1612 = vadd.xlane.f32.xlu0 %v1611
        %v1613 = vpop.xlane.xlu0 %1612
        %v1614 = vrcp.pop %v1610
        %v1615 = vrcp.pop %v1613
        %v1616 = vadd.f32 %v1608, %v1611
        %v1617 = vrot.slane %v1616, 4
        %v1618 = vadd.f32 %v1616, %v1617
        %v1619 = vrot.slane %v1618, 2
        %v1620 = vadd.f32 %v1618, %v1619
        %v1621 = vrot.slane %v1620, 1
        %v1622 = vadd.f32 %v1620, %v1621
        %v1623 = vrcp.pop %v1622
        %1624 = vrot.lane.b32.xlu0 %v825, 112
        %v1625 = vpop.permute.xlu0 %1624
        %1626 = vrot.lane.b32.xlu0 %v830, 112
        %v1627 = vpop.permute.xlu0 %1626
        %v1631 = vsel %vm925, %v1605, 0
        %v1634 = vsel %vm925, %v1607, 0
        %1636 = vmatprep.subr.mxu0 0.0
        %1637 = vmatpush1.msra.mxu0 %v1625
        %1638 = vmatprep.subr.mxu0 0.0
        %1639 = vmatpush1.msra.mxu0 %v1627
        %1640 = vmatprep.subr.mxu0 0.0
        %1641 = vmatpush1.msra.mxu0 0.0
        %1642 = vmatprep.subr.mxu0 0.0
        %1643 = vmatpush1.msra.mxu0 0.0
        %1644 = vmatprep.subr.mxu0 0.0
        %1645 = vmatpush1.msra.mxu0 0.0
        %1646 = vmatprep.subr.mxu0 0.0
        %1647 = vmatpush1.msra.mxu0 0.0
        %1648 = vmatprep.subr.mxu0 0.0
        %1649 = vmatpush1.msra.mxu0 0.0
        %1650 = vmatprep.subr.mxu0 0.0
        %1651 = vmatpush1.msra.mxu0 0.0
        %1652 = vmatprep.subr.mxu0 0.0
        %1653 = vmatpush1.msra.mxu0 0.0
        %1654 = vmatprep.subr.mxu0 0.0
        %1655 = vmatpush1.msra.mxu0 0.0
        %1656 = vmatprep.subr.mxu0 0.0
        %1657 = vmatpush1.msra.mxu0 0.0
        %1658 = vmatprep.subr.mxu0 0.0
        %1659 = vmatpush1.msra.mxu0 0.0
        %1660 = vmatprep.subr.mxu0 0.0
        %1661 = vmatpush1.msra.mxu0 0.0
        %1662 = vmatprep.subr.mxu0 0.0
        %1663 = vmatpush1.msra.mxu0 0.0
        %1664 = vmatprep.subr.mxu0 0.0
        %1665 = vmatpush1.msra.mxu0 0.0
        %1666 = vmatprep.subr.mxu0 0.0
        %1667 = vmatpush1.msra.mxu0 0.0
        %1668 = vmatprep.subr.mxu0 0.0
        %1669 = vmatpush1.msra.mxu0 0.0
        %1670 = vmatprep.subr.mxu0 0.0
        %1671 = vmatpush1.msra.mxu0 0.0
        %1672 = vmatprep.subr.mxu0 0.0
        %1673 = vmatpush1.msra.mxu0 0.0
        %1674 = vmatprep.subr.mxu0 0.0
        %1675 = vmatpush1.msra.mxu0 0.0
        %1676 = vmatprep.subr.mxu0 0.0
        %1677 = vmatpush1.msra.mxu0 0.0
        %1678 = vmatprep.subr.mxu0 0.0
        %1679 = vmatpush1.msra.mxu0 0.0
        %1680 = vmatprep.subr.mxu0 0.0
        %1681 = vmatpush1.msra.mxu0 0.0
        %1682 = vmatprep.subr.mxu0 0.0
        %1683 = vmatpush1.msra.mxu0 0.0
        %1684 = vmatprep.subr.mxu0 0.0
        %1685 = vmatpush1.msra.mxu0 0.0
        %1686 = vmatprep.subr.mxu0 0.0
        %1687 = vmatpush1.msra.mxu0 0.0
        %1688 = vmatprep.subr.mxu0 0.0
        %1689 = vmatpush1.msra.mxu0 0.0
        %1690 = vmatprep.subr.mxu0 0.0
        %1691 = vmatpush1.msra.mxu0 0.0
        %1692 = vmatprep.subr.mxu0 0.0
        %1693 = vmatpush1.msra.mxu0 0.0
        %1694 = vmatprep.subr.mxu0 0.0
        %1695 = vmatpush1.msra.mxu0 0.0
        %1696 = vmatprep.subr.mxu0 0.0
        %1697 = vmatpush1.msra.mxu0 0.0
        %1698 = vmatprep.subr.mxu0 0.0
        %1699 = vmatpush1.msra.mxu0 0.0
        %1700 = vmatprep.mubr.f32.mxu0 0.0
        %1701 = vmatmul.mubr.f32.gmra.mrb[0].mxu0 %v1631
        %v1702 = vpop.f32.mrb[0].mxu0
        %v1703 = vadd.f32 0.0, %v1702
        %v1704 = vpop.f32.mrb[0].mxu0
        %1705 = vmatprep.mubr.f32.mxu0 0.0
        %1706 = vmatmul.mubr.f32.gmra.mrb[0].mxu0 %v1634
        %v1707 = vpop.f32.mrb[0].mxu0
        %v1708 = vadd.f32 0.0, %v1707
        %v1709 = vpop.f32.mrb[0].mxu0
        %1710 = vdwg.mxu0
        %v1711 = vmul.f32 %v1614, %v1703
        %v1712 = vmul.f32 %v1615, %v1708
        %1715 = vrot.lane.b32.xlu0 %v1711, 16
        %v1716 = vpop.permute.xlu0 %1715
        %1717 = vrot.lane.b32.xlu0 %v1712, 16
        %v1718 = vpop.permute.xlu0 %1717
        %vm1721 = vcmask 195712
        %1722 = vst.msk [vmem:[#allocation2] sm:$0xff] %vm1721, %v1716
        %1723 = vst.msk [vmem:[#allocation2 + $0x8] sm:$0xff] %vm1721, %v1718
        %1724 = vrot.lane.b32.xlu0 %v825, 48
        %v1725 = vpop.permute.xlu0 %1724
        %1726 = vrot.lane.b32.xlu0 %v830, 48
        %v1727 = vpop.permute.xlu0 %1726
        %1730 = vxpose.xlu0.b32.start [1/16] %v1725, 128
        %1731 = vxpose.xlu0.b32.cont [2/16] %v1727, 128
        %1732 = vxpose.xlu0.b32.cont [3/16] 0.0, 128
        %1733 = vxpose.xlu0.b32.cont [4/16] 0.0, 128
        %1734 = vxpose.xlu0.b32.cont [5/16] 0.0, 128
        %1735 = vxpose.xlu0.b32.cont [6/16] 0.0, 128
        %1736 = vxpose.xlu0.b32.cont [7/16] 0.0, 128
        %1737 = vxpose.xlu0.b32.cont [8/16] 0.0, 128
        %1738 = vxpose.xlu0.b32.cont [9/16] 0.0, 128
        %1739 = vxpose.xlu0.b32.cont [10/16] 0.0, 128
        %1740 = vxpose.xlu0.b32.cont [11/16] 0.0, 128
        %1741 = vxpose.xlu0.b32.cont [12/16] 0.0, 128
        %1742 = vxpose.xlu0.b32.cont [13/16] 0.0, 128
        %1743 = vxpose.xlu0.b32.cont [14/16] 0.0, 128
        %1744 = vxpose.xlu0.b32.cont [15/16] 0.0, 128
        %1745 = vxpose.xlu0.b32.end [16/16] 0.0, 128
        %v1746 = vpop.trf.xlu0
        %v1747 = vpop.trf.xlu0
        %v1748 = vpop.trf.xlu0
        %v1749 = vpop.trf.xlu0
        %v1750 = vpop.trf.xlu0
        %v1751 = vpop.trf.xlu0
        %v1752 = vpop.trf.xlu0
        %v1753 = vpop.trf.xlu0
        %v1754 = vpop.trf.xlu0
        %v1755 = vpop.trf.xlu0
        %v1756 = vpop.trf.xlu0
        %v1757 = vpop.trf.xlu0
        %v1758 = vpop.trf.xlu0
        %v1759 = vpop.trf.xlu0
        %v1760 = vpop.trf.xlu0
        %v1761 = vpop.trf.xlu0
        %v1763 = vsel %vm925, %v1746, 0
        %1765 = vmatprep.subr.mxu0 0.0
        %1766 = vmatpush1.msra.mxu0 %v1605
        %1767 = vmatprep.subr.mxu0 0.0
        %1768 = vmatpush1.msra.mxu0 %v1607
        %1769 = vmatprep.subr.mxu0 0.0
        %1770 = vmatpush1.msra.mxu0 0.0
        %1771 = vmatprep.subr.mxu0 0.0
        %1772 = vmatpush1.msra.mxu0 0.0
        %1773 = vmatprep.subr.mxu0 0.0
        %1774 = vmatpush1.msra.mxu0 0.0
        %1775 = vmatprep.subr.mxu0 0.0
        %1776 = vmatpush1.msra.mxu0 0.0
        %1777 = vmatprep.subr.mxu0 0.0
        %1778 = vmatpush1.msra.mxu0 0.0
        %1779 = vmatprep.subr.mxu0 0.0
        %1780 = vmatpush1.msra.mxu0 0.0
        %1781 = vmatprep.subr.mxu0 0.0
        %1782 = vmatpush1.msra.mxu0 0.0
        %1783 = vmatprep.subr.mxu0 0.0
        %1784 = vmatpush1.msra.mxu0 0.0
        %1785 = vmatprep.subr.mxu0 0.0
        %1786 = vmatpush1.msra.mxu0 0.0
        %1787 = vmatprep.subr.mxu0 0.0
        %1788 = vmatpush1.msra.mxu0 0.0
        %1789 = vmatprep.subr.mxu0 0.0
        %1790 = vmatpush1.msra.mxu0 0.0
        %1791 = vmatprep.subr.mxu0 0.0
        %1792 = vmatpush1.msra.mxu0 0.0
        %1793 = vmatprep.subr.mxu0 0.0
        %1794 = vmatpush1.msra.mxu0 0.0
        %1795 = vmatprep.subr.mxu0 0.0
        %1796 = vmatpush1.msra.mxu0 0.0
        %1797 = vmatprep.subr.mxu0 0.0
        %1798 = vmatpush1.msra.mxu0 0.0
        %1799 = vmatprep.subr.mxu0 0.0
        %1800 = vmatpush1.msra.mxu0 0.0
        %1801 = vmatprep.subr.mxu0 0.0
        %1802 = vmatpush1.msra.mxu0 0.0
        %1803 = vmatprep.subr.mxu0 0.0
        %1804 = vmatpush1.msra.mxu0 0.0
        %1805 = vmatprep.subr.mxu0 0.0
        %1806 = vmatpush1.msra.mxu0 0.0
        %1807 = vmatprep.subr.mxu0 0.0
        %1808 = vmatpush1.msra.mxu0 0.0
        %1809 = vmatprep.subr.mxu0 0.0
        %1810 = vmatpush1.msra.mxu0 0.0
        %1811 = vmatprep.subr.mxu0 0.0
        %1812 = vmatpush1.msra.mxu0 0.0
        %1813 = vmatprep.subr.mxu0 0.0
        %1814 = vmatpush1.msra.mxu0 0.0
        %1815 = vmatprep.subr.mxu0 0.0
        %1816 = vmatpush1.msra.mxu0 0.0
        %1817 = vmatprep.subr.mxu0 0.0
        %1818 = vmatpush1.msra.mxu0 0.0
        %1819 = vmatprep.subr.mxu0 0.0
        %1820 = vmatpush1.msra.mxu0 0.0
        %1821 = vmatprep.subr.mxu0 0.0
        %1822 = vmatpush1.msra.mxu0 0.0
        %1823 = vmatprep.subr.mxu0 0.0
        %1824 = vmatpush1.msra.mxu0 0.0
        %1825 = vmatprep.subr.mxu0 0.0
        %1826 = vmatpush1.msra.mxu0 0.0
        %1827 = vmatprep.subr.mxu0 0.0
        %1828 = vmatpush1.msra.mxu0 0.0
        %1829 = vmatprep.mubr.f32.mxu0 0.0
        %1830 = vmatmul.mubr.f32.gmra.mrb[0].mxu0 %v1763
        %v1831 = vpop.f32.mrb[0].mxu0
        %v1832 = vadd.f32 0.0, %v1831
        %v1833 = vpop.f32.mrb[0].mxu0
        %1834 = vdwg.mxu0
        %v1835 = vmul.f32 %v1832, %v1623
        %1836 = vst.msk [vmem:[%s552 + $0x10] sm:$0xff] %vm925, %v1835
        %1837 = vrot.lane.b32.xlu0 %v739, 104
        %v1838 = vpop.permute.xlu0 %1837
        %1839 = vrot.lane.b32.xlu0 %v740, 104
        %v1840 = vpop.permute.xlu0 %1839
        %1841 = vrot.lane.b32.xlu0 %v825, 72
        %v1842 = vpop.permute.xlu0 %1841
        %1843 = vrot.lane.b32.xlu0 %v830, 72
        %v1844 = vpop.permute.xlu0 %1843
        %v1845 = vsel %vm839, %v1838, 0
        %v1847 = vsel %vm839, %v1840, 0
        %v1849 = vsel %vm839, %v1842, 0
        %v1851 = vsel %vm839, %v1844, 0
        %1853 = vmatprep.subr.mxu0 0.0
        %1854 = vmatpush1.xpose.msra.mxu0 %v1849
        %1855 = vmatprep.subr.mxu0 0.0
        %1856 = vmatpush1.xpose.msra.mxu0 %v1851
        %1857 = vmatprep.subr.mxu0 0.0
        %1858 = vmatpush1.xpose.msra.mxu0 0.0
        %1859 = vmatprep.subr.mxu0 0.0
        %1860 = vmatpush1.xpose.msra.mxu0 0.0
        %1861 = vmatprep.subr.mxu0 0.0
        %1862 = vmatpush1.xpose.msra.mxu0 0.0
        %1863 = vmatprep.subr.mxu0 0.0
        %1864 = vmatpush1.xpose.msra.mxu0 0.0
        %1865 = vmatprep.subr.mxu0 0.0
        %1866 = vmatpush1.xpose.msra.mxu0 0.0
        %1867 = vmatprep.subr.mxu0 0.0
        %1868 = vmatpush1.xpose.msra.mxu0 0.0
        %1869 = vmatprep.subr.mxu0 0.0
        %1870 = vmatpush1.xpose.msra.mxu0 0.0
        %1871 = vmatprep.subr.mxu0 0.0
        %1872 = vmatpush1.xpose.msra.mxu0 0.0
        %1873 = vmatprep.subr.mxu0 0.0
        %1874 = vmatpush1.xpose.msra.mxu0 0.0
        %1875 = vmatprep.subr.mxu0 0.0
        %1876 = vmatpush1.xpose.msra.mxu0 0.0
        %1877 = vmatprep.subr.mxu0 0.0
        %1878 = vmatpush1.xpose.msra.mxu0 0.0
        %1879 = vmatprep.subr.mxu0 0.0
        %1880 = vmatpush1.xpose.msra.mxu0 0.0
        %1881 = vmatprep.subr.mxu0 0.0
        %1882 = vmatpush1.xpose.msra.mxu0 0.0
        %1883 = vmatprep.subr.mxu0 0.0
        %1884 = vmatpush1.xpose.msra.mxu0 0.0
        %1885 = vmatprep.subr.mxu0 0.0
        %1886 = vmatpush1.xpose.msra.mxu0 0.0
        %1887 = vmatprep.subr.mxu0 0.0
        %1888 = vmatpush1.xpose.msra.mxu0 0.0
        %1889 = vmatprep.subr.mxu0 0.0
        %1890 = vmatpush1.xpose.msra.mxu0 0.0
        %1891 = vmatprep.subr.mxu0 0.0
        %1892 = vmatpush1.xpose.msra.mxu0 0.0
        %1893 = vmatprep.subr.mxu0 0.0
        %1894 = vmatpush1.xpose.msra.mxu0 0.0
        %1895 = vmatprep.subr.mxu0 0.0
        %1896 = vmatpush1.xpose.msra.mxu0 0.0
        %1897 = vmatprep.subr.mxu0 0.0
        %1898 = vmatpush1.xpose.msra.mxu0 0.0
        %1899 = vmatprep.subr.mxu0 0.0
        %1900 = vmatpush1.xpose.msra.mxu0 0.0
        %1901 = vmatprep.subr.mxu0 0.0
        %1902 = vmatpush1.xpose.msra.mxu0 0.0
        %1903 = vmatprep.subr.mxu0 0.0
        %1904 = vmatpush1.xpose.msra.mxu0 0.0
        %1905 = vmatprep.subr.mxu0 0.0
        %1906 = vmatpush1.xpose.msra.mxu0 0.0
        %1907 = vmatprep.subr.mxu0 0.0
        %1908 = vmatpush1.xpose.msra.mxu0 0.0
        %1909 = vmatprep.subr.mxu0 0.0
        %1910 = vmatpush1.xpose.msra.mxu0 0.0
        %1911 = vmatprep.subr.mxu0 0.0
        %1912 = vmatpush1.xpose.msra.mxu0 0.0
        %1913 = vmatprep.subr.mxu0 0.0
        %1914 = vmatpush1.xpose.msra.mxu0 0.0
        %1915 = vmatprep.subr.mxu0 0.0
        %1916 = vmatpush1.xpose.msra.mxu0 0.0
        %1917 = vmatprep.mubr.f32.mxu0 0.0
        %1918 = vmatmul.mubr.f32.gmra.mrb[0].mxu0 %v1845
        %v1919 = vpop.f32.mrb[0].mxu0
        %v1920 = vadd.f32 0.0, %v1919
        %v1921 = vpop.f32.mrb[0].mxu0
        %1922 = vmatprep.mubr.f32.mxu0 0.0
        %1923 = vmatmul.mubr.f32.gmra.mrb[0].mxu0 %v1847
        %v1924 = vpop.f32.mrb[0].mxu0
        %v1925 = vadd.f32 0.0, %v1924
        %v1926 = vpop.f32.mrb[0].mxu0
        %1927 = vdwg.mxu0
        %v1928 = vsel %vm925, %v1920, -inf
        %v1929 = vsel %vm925, %v1925, -inf
        %v1930 = vmax.f32 %v1928, %v1929
        %1931 = vmax.xlane.f32.xlu0 %v1930
        %v1932 = vpop.xlane.xlu0 %1931
        %v1933 = vrot.slane %v1932, 4
        %v1934 = vmax.f32 %v1932, %v1933
        %v1935 = vrot.slane %v1934, 2
        %v1936 = vmax.f32 %v1934, %v1935
        %v1937 = vrot.slane %v1936, 1
        %v1938 = vmax.f32 %v1936, %v1937
        %s1939 = vtos %v1938
        %v1940 = vstv %s1939
        %v1941 = vsub.f32 %v1920, %v1940
        %v1942 = vsub.f32 %v1925, %v1940
        %v1943 = vmul.f32 %v1941, 1.442695
        %v1944 = vpow.pop %v1943
        %v1945 = vmul.f32 %v1942, 1.442695
        %v1946 = vpow.pop %v1945
        %v1947 = vsel %vm925, %v1944, 0.0
        %1948 = vadd.xlane.f32.xlu0 %v1947
        %v1949 = vpop.xlane.xlu0 %1948
        %v1950 = vsel %vm925, %v1946, 0.0
        %1951 = vadd.xlane.f32.xlu0 %v1950
        %v1952 = vpop.xlane.xlu0 %1951
        %v1953 = vrcp.pop %v1949
        %v1954 = vrcp.pop %v1952
        %v1955 = vadd.f32 %v1947, %v1950
        %v1956 = vrot.slane %v1955, 4
        %v1957 = vadd.f32 %v1955, %v1956
        %v1958 = vrot.slane %v1957, 2
        %v1959 = vadd.f32 %v1957, %v1958
        %v1960 = vrot.slane %v1959, 1
        %v1961 = vadd.f32 %v1959, %v1960
        %v1962 = vrcp.pop %v1961
        %1963 = vrot.lane.b32.xlu0 %v825, 104
        %v1964 = vpop.permute.xlu0 %1963
        %1965 = vrot.lane.b32.xlu0 %v830, 104
        %v1966 = vpop.permute.xlu0 %1965
        %v1970 = vsel %vm925, %v1944, 0
        %v1973 = vsel %vm925, %v1946, 0
        %1975 = vmatprep.subr.mxu0 0.0
        %1976 = vmatpush1.msra.mxu0 %v1964
        %1977 = vmatprep.subr.mxu0 0.0
        %1978 = vmatpush1.msra.mxu0 %v1966
        %1979 = vmatprep.subr.mxu0 0.0
        %1980 = vmatpush1.msra.mxu0 0.0
        %1981 = vmatprep.subr.mxu0 0.0
        %1982 = vmatpush1.msra.mxu0 0.0
        %1983 = vmatprep.subr.mxu0 0.0
        %1984 = vmatpush1.msra.mxu0 0.0
        %1985 = vmatprep.subr.mxu0 0.0
        %1986 = vmatpush1.msra.mxu0 0.0
        %1987 = vmatprep.subr.mxu0 0.0
        %1988 = vmatpush1.msra.mxu0 0.0
        %1989 = vmatprep.subr.mxu0 0.0
        %1990 = vmatpush1.msra.mxu0 0.0
        %1991 = vmatprep.subr.mxu0 0.0
        %1992 = vmatpush1.msra.mxu0 0.0
        %1993 = vmatprep.subr.mxu0 0.0
        %1994 = vmatpush1.msra.mxu0 0.0
        %1995 = vmatprep.subr.mxu0 0.0
        %1996 = vmatpush1.msra.mxu0 0.0
        %1997 = vmatprep.subr.mxu0 0.0
        %1998 = vmatpush1.msra.mxu0 0.0
        %1999 = vmatprep.subr.mxu0 0.0
        %2000 = vmatpush1.msra.mxu0 0.0
        %2001 = vmatprep.subr.mxu0 0.0
        %2002 = vmatpush1.msra.mxu0 0.0
        %2003 = vmatprep.subr.mxu0 0.0
        %2004 = vmatpush1.msra.mxu0 0.0
        %2005 = vmatprep.subr.mxu0 0.0
        %2006 = vmatpush1.msra.mxu0 0.0
        %2007 = vmatprep.subr.mxu0 0.0
        %2008 = vmatpush1.msra.mxu0 0.0
        %2009 = vmatprep.subr.mxu0 0.0
        %2010 = vmatpush1.msra.mxu0 0.0
        %2011 = vmatprep.subr.mxu0 0.0
        %2012 = vmatpush1.msra.mxu0 0.0
        %2013 = vmatprep.subr.mxu0 0.0
        %2014 = vmatpush1.msra.mxu0 0.0
        %2015 = vmatprep.subr.mxu0 0.0
        %2016 = vmatpush1.msra.mxu0 0.0
        %2017 = vmatprep.subr.mxu0 0.0
        %2018 = vmatpush1.msra.mxu0 0.0
        %2019 = vmatprep.subr.mxu0 0.0
        %2020 = vmatpush1.msra.mxu0 0.0
        %2021 = vmatprep.subr.mxu0 0.0
        %2022 = vmatpush1.msra.mxu0 0.0
        %2023 = vmatprep.subr.mxu0 0.0
        %2024 = vmatpush1.msra.mxu0 0.0
        %2025 = vmatprep.subr.mxu0 0.0
        %2026 = vmatpush1.msra.mxu0 0.0
        %2027 = vmatprep.subr.mxu0 0.0
        %2028 = vmatpush1.msra.mxu0 0.0
        %2029 = vmatprep.subr.mxu0 0.0
        %2030 = vmatpush1.msra.mxu0 0.0
        %2031 = vmatprep.subr.mxu0 0.0
        %2032 = vmatpush1.msra.mxu0 0.0
        %2033 = vmatprep.subr.mxu0 0.0
        %2034 = vmatpush1.msra.mxu0 0.0
        %2035 = vmatprep.subr.mxu0 0.0
        %2036 = vmatpush1.msra.mxu0 0.0
        %2037 = vmatprep.subr.mxu0 0.0
        %2038 = vmatpush1.msra.mxu0 0.0
        %2039 = vmatprep.mubr.f32.mxu0 0.0
        %2040 = vmatmul.mubr.f32.gmra.mrb[0].mxu0 %v1970
        %v2041 = vpop.f32.mrb[0].mxu0
        %v2042 = vadd.f32 0.0, %v2041
        %v2043 = vpop.f32.mrb[0].mxu0
        %2044 = vmatprep.mubr.f32.mxu0 0.0
        %2045 = vmatmul.mubr.f32.gmra.mrb[0].mxu0 %v1973
        %v2046 = vpop.f32.mrb[0].mxu0
        %v2047 = vadd.f32 0.0, %v2046
        %v2048 = vpop.f32.mrb[0].mxu0
        %2049 = vdwg.mxu0
        %v2050 = vmul.f32 %v1953, %v2042
        %v2051 = vmul.f32 %v1954, %v2047
        %2054 = vrot.lane.b32.xlu0 %v2050, 24
        %v2055 = vpop.permute.xlu0 %2054
        %2056 = vrot.lane.b32.xlu0 %v2051, 24
        %v2057 = vpop.permute.xlu0 %2056
        %vm2060 = vcmask 261312
        %2061 = vst.msk [vmem:[#allocation2] sm:$0xff] %vm2060, %v2055
        %2062 = vst.msk [vmem:[#allocation2 + $0x8] sm:$0xff] %vm2060, %v2057
        %2063 = vrot.lane.b32.xlu0 %v825, 40
        %v2064 = vpop.permute.xlu0 %2063
        %2065 = vrot.lane.b32.xlu0 %v830, 40
        %v2066 = vpop.permute.xlu0 %2065
        %2069 = vxpose.xlu0.b32.start [1/16] %v2064, 128
        %2070 = vxpose.xlu0.b32.cont [2/16] %v2066, 128
        %2071 = vxpose.xlu0.b32.cont [3/16] 0.0, 128
        %2072 = vxpose.xlu0.b32.cont [4/16] 0.0, 128
        %2073 = vxpose.xlu0.b32.cont [5/16] 0.0, 128
        %2074 = vxpose.xlu0.b32.cont [6/16] 0.0, 128
        %2075 = vxpose.xlu0.b32.cont [7/16] 0.0, 128
        %2076 = vxpose.xlu0.b32.cont [8/16] 0.0, 128
        %2077 = vxpose.xlu0.b32.cont [9/16] 0.0, 128
        %2078 = vxpose.xlu0.b32.cont [10/16] 0.0, 128
        %2079 = vxpose.xlu0.b32.cont [11/16] 0.0, 128
        %2080 = vxpose.xlu0.b32.cont [12/16] 0.0, 128
        %2081 = vxpose.xlu0.b32.cont [13/16] 0.0, 128
        %2082 = vxpose.xlu0.b32.cont [14/16] 0.0, 128
        %2083 = vxpose.xlu0.b32.cont [15/16] 0.0, 128
        %2084 = vxpose.xlu0.b32.end [16/16] 0.0, 128
        %v2085 = vpop.trf.xlu0
        %v2086 = vpop.trf.xlu0
        %v2087 = vpop.trf.xlu0
        %v2088 = vpop.trf.xlu0
        %v2089 = vpop.trf.xlu0
        %v2090 = vpop.trf.xlu0
        %v2091 = vpop.trf.xlu0
        %v2092 = vpop.trf.xlu0
        %v2093 = vpop.trf.xlu0
        %v2094 = vpop.trf.xlu0
        %v2095 = vpop.trf.xlu0
        %v2096 = vpop.trf.xlu0
        %v2097 = vpop.trf.xlu0
        %v2098 = vpop.trf.xlu0
        %v2099 = vpop.trf.xlu0
        %v2100 = vpop.trf.xlu0
        %v2102 = vsel %vm925, %v2085, 0
        %2104 = vmatprep.subr.mxu0 0.0
        %2105 = vmatpush1.msra.mxu0 %v1944
        %2106 = vmatprep.subr.mxu0 0.0
        %2107 = vmatpush1.msra.mxu0 %v1946
        %2108 = vmatprep.subr.mxu0 0.0
        %2109 = vmatpush1.msra.mxu0 0.0
        %2110 = vmatprep.subr.mxu0 0.0
        %2111 = vmatpush1.msra.mxu0 0.0
        %2112 = vmatprep.subr.mxu0 0.0
        %2113 = vmatpush1.msra.mxu0 0.0
        %2114 = vmatprep.subr.mxu0 0.0
        %2115 = vmatpush1.msra.mxu0 0.0
        %2116 = vmatprep.subr.mxu0 0.0
        %2117 = vmatpush1.msra.mxu0 0.0
        %2118 = vmatprep.subr.mxu0 0.0
        %2119 = vmatpush1.msra.mxu0 0.0
        %2120 = vmatprep.subr.mxu0 0.0
        %2121 = vmatpush1.msra.mxu0 0.0
        %2122 = vmatprep.subr.mxu0 0.0
        %2123 = vmatpush1.msra.mxu0 0.0
        %2124 = vmatprep.subr.mxu0 0.0
        %2125 = vmatpush1.msra.mxu0 0.0
        %2126 = vmatprep.subr.mxu0 0.0
        %2127 = vmatpush1.msra.mxu0 0.0
        %2128 = vmatprep.subr.mxu0 0.0
        %2129 = vmatpush1.msra.mxu0 0.0
        %2130 = vmatprep.subr.mxu0 0.0
        %2131 = vmatpush1.msra.mxu0 0.0
        %2132 = vmatprep.subr.mxu0 0.0
        %2133 = vmatpush1.msra.mxu0 0.0
        %2134 = vmatprep.subr.mxu0 0.0
        %2135 = vmatpush1.msra.mxu0 0.0
        %2136 = vmatprep.subr.mxu0 0.0
        %2137 = vmatpush1.msra.mxu0 0.0
        %2138 = vmatprep.subr.mxu0 0.0
        %2139 = vmatpush1.msra.mxu0 0.0
        %2140 = vmatprep.subr.mxu0 0.0
        %2141 = vmatpush1.msra.mxu0 0.0
        %2142 = vmatprep.subr.mxu0 0.0
        %2143 = vmatpush1.msra.mxu0 0.0
        %2144 = vmatprep.subr.mxu0 0.0
        %2145 = vmatpush1.msra.mxu0 0.0
        %2146 = vmatprep.subr.mxu0 0.0
        %2147 = vmatpush1.msra.mxu0 0.0
        %2148 = vmatprep.subr.mxu0 0.0
        %2149 = vmatpush1.msra.mxu0 0.0
        %2150 = vmatprep.subr.mxu0 0.0
        %2151 = vmatpush1.msra.mxu0 0.0
        %2152 = vmatprep.subr.mxu0 0.0
        %2153 = vmatpush1.msra.mxu0 0.0
        %2154 = vmatprep.subr.mxu0 0.0
        %2155 = vmatpush1.msra.mxu0 0.0
        %2156 = vmatprep.subr.mxu0 0.0
        %2157 = vmatpush1.msra.mxu0 0.0
        %2158 = vmatprep.subr.mxu0 0.0
        %2159 = vmatpush1.msra.mxu0 0.0
        %2160 = vmatprep.subr.mxu0 0.0
        %2161 = vmatpush1.msra.mxu0 0.0
        %2162 = vmatprep.subr.mxu0 0.0
        %2163 = vmatpush1.msra.mxu0 0.0
        %2164 = vmatprep.subr.mxu0 0.0
        %2165 = vmatpush1.msra.mxu0 0.0
        %2166 = vmatprep.subr.mxu0 0.0
        %2167 = vmatpush1.msra.mxu0 0.0
        %2168 = vmatprep.mubr.f32.mxu0 0.0
        %2169 = vmatmul.mubr.f32.gmra.mrb[0].mxu0 %v2102
        %v2170 = vpop.f32.mrb[0].mxu0
        %v2171 = vadd.f32 0.0, %v2170
        %v2172 = vpop.f32.mrb[0].mxu0
        %2173 = vdwg.mxu0
        %v2174 = vmul.f32 %v2171, %v1962
        %2175 = vst.msk [vmem:[%s552 + $0x18] sm:$0xff] %vm925, %v2174
        %v2176 = vld [vmem:[#allocation2] sm:$0xff]
        %v2177 = vld [vmem:[#allocation2 + $0x8] sm:$0xff]
        %v2178 = vld [vmem:[%s10] sm:$0xff]
        %v2179 = vld [vmem:[%s10 + $0x8] sm:$0xff]
        %v2180 = vld [vmem:[%s10 + $0x10] sm:$0xff]
        %v2181 = vld [vmem:[%s10 + $0x18] sm:$0xff]
        %v2182 = vld [vmem:[%s11] sm:$0x1]
        %v2184 = vlaneseq
        %v2185 = vshrl.u32 %v2184, 7
        %v2186 = vsub.s32 0, %v2185
        %v2187 = vrot.slane %v2182, %v2186
        %v2190 = vsel %vm557, %v2176, 0
        %v2193 = vsel %vm557, %v2177, 0
        %2195 = vmatprep.subr.mxu0 0.0
        %2196 = vmatpush1.msra.mxu0 %v2178
        %2197 = vmatprep.subr.mxu0 0.0
        %2198 = vmatpush1.msra.mxu0 %v2179
        %2199 = vmatprep.subr.mxu0 0.0
        %2200 = vmatpush1.msra.mxu0 %v2180
        %2201 = vmatprep.subr.mxu0 0.0
        %2202 = vmatpush1.msra.mxu0 %v2181
        %2203 = vmatprep.subr.mxu0 0.0
        %2204 = vmatpush1.msra.mxu0 0.0
        %2205 = vmatprep.subr.mxu0 0.0
        %2206 = vmatpush1.msra.mxu0 0.0
        %2207 = vmatprep.subr.mxu0 0.0
        %2208 = vmatpush1.msra.mxu0 0.0
        %2209 = vmatprep.subr.mxu0 0.0
        %2210 = vmatpush1.msra.mxu0 0.0
        %2211 = vmatprep.subr.mxu0 0.0
        %2212 = vmatpush1.msra.mxu0 0.0
        %2213 = vmatprep.subr.mxu0 0.0
        %2214 = vmatpush1.msra.mxu0 0.0
        %2215 = vmatprep.subr.mxu0 0.0
        %2216 = vmatpush1.msra.mxu0 0.0
        %2217 = vmatprep.subr.mxu0 0.0
        %2218 = vmatpush1.msra.mxu0 0.0
        %2219 = vmatprep.subr.mxu0 0.0
        %2220 = vmatpush1.msra.mxu0 0.0
        %2221 = vmatprep.subr.mxu0 0.0
        %2222 = vmatpush1.msra.mxu0 0.0
        %2223 = vmatprep.subr.mxu0 0.0
        %2224 = vmatpush1.msra.mxu0 0.0
        %2225 = vmatprep.subr.mxu0 0.0
        %2226 = vmatpush1.msra.mxu0 0.0
        %2227 = vmatprep.subr.mxu0 0.0
        %2228 = vmatpush1.msra.mxu0 0.0
        %2229 = vmatprep.subr.mxu0 0.0
        %2230 = vmatpush1.msra.mxu0 0.0
        %2231 = vmatprep.subr.mxu0 0.0
        %2232 = vmatpush1.msra.mxu0 0.0
        %2233 = vmatprep.subr.mxu0 0.0
        %2234 = vmatpush1.msra.mxu0 0.0
        %2235 = vmatprep.subr.mxu0 0.0
        %2236 = vmatpush1.msra.mxu0 0.0
        %2237 = vmatprep.subr.mxu0 0.0
        %2238 = vmatpush1.msra.mxu0 0.0
        %2239 = vmatprep.subr.mxu0 0.0
        %2240 = vmatpush1.msra.mxu0 0.0
        %2241 = vmatprep.subr.mxu0 0.0
        %2242 = vmatpush1.msra.mxu0 0.0
        %2243 = vmatprep.subr.mxu0 0.0
        %2244 = vmatpush1.msra.mxu0 0.0
        %2245 = vmatprep.subr.mxu0 0.0
        %2246 = vmatpush1.msra.mxu0 0.0
        %2247 = vmatprep.subr.mxu0 0.0
        %2248 = vmatpush1.msra.mxu0 0.0
        %2249 = vmatprep.subr.mxu0 0.0
        %2250 = vmatpush1.msra.mxu0 0.0
        %2251 = vmatprep.subr.mxu0 0.0
        %2252 = vmatpush1.msra.mxu0 0.0
        %2253 = vmatprep.subr.mxu0 0.0
        %2254 = vmatpush1.msra.mxu0 0.0
        %2255 = vmatprep.subr.mxu0 0.0
        %2256 = vmatpush1.msra.mxu0 0.0
        %2257 = vmatprep.subr.mxu0 0.0
        %2258 = vmatpush1.msra.mxu0 0.0
        %2259 = vmatprep.mubr.f32.mxu0 0.0
        %2260 = vmatmul.mubr.f32.gmra.mrb[0].mxu0 %v2190
        %v2261 = vpop.f32.mrb[0].mxu0
        %v2262 = vadd.f32 %v2187, %v2261
        %v2263 = vpop.f32.mrb[0].mxu0
        %2264 = vmatprep.mubr.f32.mxu0 0.0
        %2265 = vmatmul.mubr.f32.gmra.mrb[0].mxu0 %v2193
        %v2266 = vpop.f32.mrb[0].mxu0
        %v2267 = vadd.f32 %v2187, %v2266
        %v2268 = vpop.f32.mrb[0].mxu0
        %2269 = vdwg.mxu0
        %2270 = vst.msk [vmem:[%s540] sm:$0xff] %vm557, %v2262
        %2271 = vst.msk [vmem:[%s540 + $0x8] sm:$0xff] %vm557, %v2267
        %s2272 = sand.u32 %s305, 1
        %s2273 = scalar_lea.sflag [#allocation5], %s2272
        %s2274 = sand.u32 %s305, 1
        %s2275 = smul.addr %s2274, 16
        %s2276 = scalar_lea.vmem [#allocation12], %s2275
        %p2277 = scmp.lt.s32.totalorder %s35, 1
        %s2278 = scalar_select %p2277, %s35, 1
        %s2279 = smul.addr %s2278, 4
        %s2280 = smul.addr %s2279, 8
        %s2281 = scalar_lea.vmem %s13, %s2280
        // Predicated region
        $region89: #{tpu_custom_call.1} parent=67 // pred_check
          %p2282 = pneg %p315
        $region90: #{tpu_custom_call.1} parent=67 // pred_check_branch
          %2284 = sbr.rel (%p2282) target = $region92
        $region91: #{tpu_custom_call.1} parent=67 // pred_region
          %s2286 = ssub.s32 256, 256
          %2287 = vsyncadd %s2273, %s2286
          %s2288 = smul.addr %s35, 2
          %s2289 = smul.addr %s2288, 128
          %s2290 = scalar_lea.hbm %s12, %s2289
          %s2291 = sshll.u32 %s2276, 4
          %s2292 = int_to_ptr.vmem [resolvable:$true] %s2291
          %2297 = dma.vmem_to_hbm [thread:$0]  %s2292, 256, %s2290, %s2273, 128, 128, 8
        $region92: #{tpu_custom_call.1} parent=67 // pred_fallthru
          _
        // Predicated region
        $region93: #{tpu_custom_call.1} parent=67 // pred_check
          %p2298 = pneg %p341
        $region94: #{tpu_custom_call.1} parent=67 // pred_check_branch
          %2300 = sbr.rel (%p2298) target = $region96
        $region95: #{tpu_custom_call.1} parent=67 // pred_region
          _
        $region96: #{tpu_custom_call.1} parent=67 // pred_fallthru
          _
      $region68: #{tpu_custom_call.1} parent=5 // pred_fallthru
        _
      %p2301 = scmp.le.s32.totalorder 2, %s30
      // Predicated region
      $region97: #{tpu_custom_call.1} parent=5 // pred_check
        %p2302 = pneg %p2301
      $region98: #{tpu_custom_call.1} parent=5 // pred_check_branch
        %2304 = sbr.rel (%p2302) target = $region100
      $region99: #{tpu_custom_call.1} parent=5 // pred_region
        %s2305 = ssub.s32 %s30, 2
        // Predicated region
        $region101: #{tpu_custom_call.1} parent=99 // pred_check
          %p2306 = pneg %p321
        $region102: #{tpu_custom_call.1} parent=99 // pred_check_branch
          %2308 = sbr.rel (%p2306) target = $region104
        $region103: #{tpu_custom_call.1} parent=99 // pred_region
          %s2309 = sand.u32 %s306, 1
          %s2310 = scalar_lea.sflag [#allocation5], %s2309
          %s2311 = sand.u32 %s306, 1
          %s2312 = smul.addr %s2311, 16
          %s2313 = scalar_lea.vmem [#allocation12], %s2312
          %2314 = dma.done %s2310, 256
        $region104: #{tpu_custom_call.1} parent=99 // pred_fallthru
          _
        // Predicated region
        $region105: #{tpu_custom_call.1} parent=99 // pred_check
          %p2315 = pneg %p347
        $region106: #{tpu_custom_call.1} parent=99 // pred_check_branch
          %2317 = sbr.rel (%p2315) target = $region108
        $region107: #{tpu_custom_call.1} parent=99 // pred_region
          %p2318 = scmp.lt.s32.totalorder %s36, 1
          %s2319 = scalar_select %p2318, %s36, 1
          %s2320 = smul.addr %s2319, 4
          %s2321 = smul.addr %s2320, 8
          %s2322 = scalar_lea.vmem %s13, %s2321
        $region108: #{tpu_custom_call.1} parent=99 // pred_fallthru
          _
      $region100: #{tpu_custom_call.1} parent=5 // pred_fallthru
        _
    $region6: #{tpu_custom_call.1} parent=1 // loop_footer
      %s34 = sadd.s32 1, %s30
    $region7: #{tpu_custom_call.1} parent=1 // loop_footer_branch
      %29 = sbr.rel target = $region3
    $region8: #{tpu_custom_call.1} parent=1 // loop_exit
      _
    %2323 = vsyncpa [#allocation4], 1
    %s2324 = scalar_lea.sflag [#allocation4], 1
    %2325 = vsyncpa %s2324, 1
    %2326 = vsyncpa [#allocation7], 1
    %s2327 = scalar_lea.sflag [#allocation7], 1
    %2328 = vsyncpa %s2327, 1
    %2329 = vsyncpa [#allocation10], 1
    %2330 = vsyncpa [#allocation5], 1
    %s2331 = scalar_lea.sflag [#allocation5], 1
    %2332 = vsyncpa %s2331, 1

</llo_original>
